<compile_context>
chip_gen: v5e
topology: v5e:2x2
jax: 0.10.0
libtpu: 0.0.40
codegen_flags: <defaults>
</compile_context>

<pallas_src>
import functools

import jax
import jax.numpy as jnp
from jax import lax
from jax.experimental import pallas as pl
from jax.experimental.pallas import tpu as pltpu


# ---------------------------------------------------------------------------
# Fused Pallas kernel: conv-as-matmul (transposed) + ReLU + avg-pool x4 views + concat + MLP head
# ---------------------------------------------------------------------------
def fused_kernel(patches_t_ref, pool_ref, cw_t_ref,
                 w1_ref, b1_ref, w2_ref, b2_ref, w3_ref, b3_ref, out_ref):
    """All refs are whole-array VMEM blocks (no grid).

    patches_t_ref: (Kp, 4N*P)  transposed im2col patches; row K(=9C) is all-ones (folded conv bias),
                               remaining rows up to Kp are zero padding (sublane alignment).
    pool_ref:      (4N, 4N*P)  avg-pool matrix: pool[j, j*P + p] = 1/P
    cw_t_ref:      (F, Kp)     conv weight transposed; column K holds the conv bias
    w1/b1:         (4F, 256), (1, 256)
    w2/b2:         (256, 128), (1, 128)
    w3/b3:         (128, Cp),  (1, Cp)   (num_classes zero-padded to Cp = 128, lane-dense store)
    out_ref:       (N, Cp)
    """
    n4 = pool_ref.shape[0]            # 4*N
    f = cw_t_ref.shape[0]             # in_features F
    views = w1_ref.shape[0] // f      # 4
    n = n4 // views                   # N

    # Backbone conv (bias folded into the contraction) + ReLU, lane-dense transposed layout:
    #   y_t (F, 4N*P) = cw_t (F, Kp) @ patches_t (Kp, 4N*P)
    y_t = jnp.maximum(
        jnp.dot(cw_t_ref[...], patches_t_ref[...], preferred_element_type=jnp.float32),
        0.0)

    # Global average pool of all 4 views in one shot, directly in (sample, feature) orientation:
    #   pooled (4N, F) = pool (4N, 4N*P) · y_t (F, 4N*P)  contracting the minor dims of both
    # (no transpose of y_t is materialized; avoids the lane-sparse (2048, F) intermediate).
    pooled = lax.dot_general(pool_ref[...], y_t, (((1,), (1,)), ((), ())),
                             preferred_element_type=jnp.float32)

    # Head.  feats = concat_v(pooled_v)  =>  h1 = sum_v pooled_v @ w1[v*F:(v+1)*F, :].
    h1 = jnp.zeros((n, w1_ref.shape[1]), jnp.float32)
    for v in range(views):            # static unroll over the 4 concatenated views (tiny matmuls)
        h1 = h1 + jnp.dot(pooled[v * n:(v + 1) * n, :],
                          w1_ref[pl.ds(v * f, f), :],
                          preferred_element_type=jnp.float32)
    h1 = jnp.maximum(h1 + b1_ref[...], 0.0)
    h2 = jnp.maximum(jnp.dot(h1, w2_ref[...], preferred_element_type=jnp.float32) + b2_ref[...],
                     0.0)
    out_ref[...] = jnp.dot(h2, w3_ref[...], preferred_element_type=jnp.float32) + b3_ref[...]
    # TODO(synk): dropout omitted (inference semantics); training-mode dropout would need pltpu PRNG.


# ---------------------------------------------------------------------------
# One-time parameter packing (outside the per-call path)
# ---------------------------------------------------------------------------
def pack_params(params):
    conv_w, conv_b, w1, b1, w2, b2, w3, b3 = params
    k, f = conv_w.shape                                   # (9*C_in, F)
    kp = ((k + 1 + 7) // 8) * 8                           # +1 bias row, sublane-align to 8
    cw_t = jnp.zeros((f, kp), jnp.float32)
    cw_t = cw_t.at[:, :k].set(conv_w.T)
    cw_t = cw_t.at[:, k].set(conv_b.reshape(-1))          # folded conv bias
    cp = 128                                              # lane-align head output
    num_classes = w3.shape[1]
    w3_p = jnp.zeros((w3.shape[0], cp), jnp.float32).at[:, :num_classes].set(w3)
    b3_p = jnp.zeros((1, cp), jnp.float32).at[:, :num_classes].set(b3)
    return (cw_t, w1, b1, w2, b2, w3_p, b3_p), num_classes


# ---------------------------------------------------------------------------
# Forward (cheap XLA glue stays outside the kernel; everything heavy is in the one pallas_call)
# ---------------------------------------------------------------------------
@functools.partial(jax.jit, static_argnames=("num_classes",))
def second_stage_forward(images_nchw, packed_params, *, num_classes):
    """images_nchw: (4, N, C, H, W) -- the tuple (image1..image4) stacked along axis 0."""
    cw_t, w1, b1, w2, b2, w3_p, b3_p = packed_params
    four, n, c, h, w = images_nchw.shape
    b = four * n
    p = h * w
    kp = cw_t.shape[1]
    k = 9 * c

    # NCHW -> NHWC, fold the 4 views into the batch dim (view-major ordering).
    x = jnp.transpose(images_nchw.reshape(b, c, h, w), (0, 2, 3, 1)).astype(jnp.float32)

    # Transposed im2col: rows = 9*C taps (+ ones row for the folded bias, + zero pad to Kp),
    # columns = 4N*H*W (lane-dense).  ~3.5x less patch DMA than the old (4N*P, 128) layout.
    xp = jnp.pad(x, ((0, 0), (1, 1), (1, 1), (0, 0)))
    taps = [xp[:, dy:dy + h, dx:dx + w, :] for dy in range(3) for dx in range(3)]
    pt = jnp.transpose(jnp.stack(taps, axis=0), (0, 4, 1, 2, 3))       # (9, C, B, H, W)
    pt = pt.reshape(k, b * p)                                          # (K, 4N*P)
    patches_t = jnp.concatenate(
        [pt,
         jnp.ones((1, b * p), jnp.float32),                            # bias row
         jnp.zeros((kp - k - 1, b * p), jnp.float32)], axis=0)         # sublane pad to Kp

    # Global-avg-pool matrix (no traced inputs -> constant-folded by XLA under jit).
    pool = jnp.repeat(jnp.eye(b, dtype=jnp.float32), p, axis=1) / float(p)   # (4N, 4N*P)

    vmem = lambda: pl.BlockSpec(memory_space=pltpu.MemorySpace.VMEM)
    out_padded = pl.pallas_call(
        fused_kernel,
        out_shape=jax.ShapeDtypeStruct((n, w3_p.shape[1]), jnp.float32),
        in_specs=[vmem() for _ in range(9)],
        out_specs=vmem(),
    )(patches_t, pool, cw_t, w1, b1, w2, b2, w3_p, b3_p)

    return out_padded[:, :num_classes]                                 # (N, num_classes)


# ---------------------------------------------------------------------------
# Params / plain-JAX reference
# ---------------------------------------------------------------------------
def init_params(key, c_in, in_features, num_classes):
    ks = jax.random.split(key, 8)
    conv_w = 0.1 * jax.random.normal(ks[0], (3, 3, c_in, in_features), jnp.float32)
    conv_w = conv_w.reshape(9 * c_in, in_features)      # rows ordered (dy, dx, c) = im2col tap order
    conv_b = 0.1 * jax.random.normal(ks[1], (1, in_features), jnp.float32)
    w1 = 0.05 * jax.random.normal(ks[2], (in_features * 4, 256), jnp.float32)
    b1 = 0.05 * jax.random.normal(ks[3], (1, 256), jnp.float32)
    w2 = 0.05 * jax.random.normal(ks[4], (256, 128), jnp.float32)
    b2 = 0.05 * jax.random.normal(ks[5], (1, 128), jnp.float32)
    w3 = 0.05 * jax.random.normal(ks[6], (128, num_classes), jnp.float32)
    b3 = 0.05 * jax.random.normal(ks[7], (1, num_classes), jnp.float32)
    return (conv_w, conv_b, w1, b1, w2, b2, w3, b3)


def reference_forward(images_nchw, params):
    """Plain-JAX reference with identical math (PyTorch forward semantics)."""
    conv_w, conv_b, w1, b1, w2, b2, w3, b3 = params
    four, n, c, h, w = images_nchw.shape
    x = jnp.transpose(images_nchw.reshape(four * n, c, h, w), (0, 2, 3, 1)).astype(jnp.float32)
    xp = jnp.pad(x, ((0, 0), (1, 1), (1, 1), (0, 0)))
    taps = [xp[:, dy:dy + h, dx:dx + w, :] for dy in range(3) for dx in range(3)]
    patches = jnp.stack(taps, axis=3).reshape(four * n, h * w, 9 * c)
    y = jnp.maximum(patches @ conv_w + conv_b, 0.0)
    feats = jnp.mean(y, axis=1)                                        # (4N, F)
    f = feats.shape[-1]
    feats = jnp.transpose(feats.reshape(four, n, f), (1, 0, 2)).reshape(n, four * f)
    hh = jnp.maximum(feats @ w1 + b1, 0.0)
    hh = jnp.maximum(hh @ w2 + b2, 0.0)
    return hh @ w3 + b3


if __name__ == "__main__":
    batch, c_in, hw = 2, 4, 16
    in_features, num_classes = 32, 5

    key = jax.random.PRNGKey(0)
    k_img, k_par = jax.random.split(key)
    # Four input images, each NCHW (2, 4, 16, 16), stacked along a leading axis.
    images = jax.random.normal(k_img, (4, batch, c_in, hw, hw), jnp.float32)
    params = init_params(k_par, c_in, in_features, num_classes)
    packed, n_cls = pack_params(params)

    out = second_stage_forward(images, packed, num_classes=n_cls)
    out = jax.block_until_ready(out)

    ref = reference_forward(images, params)
    assert out.shape == (batch, num_classes), out.shape
    assert jnp.allclose(out, ref, atol=1e-4, rtol=1e-3), "mismatch vs plain-JAX reference"

    print("KERNEL_OK")
</pallas_src>

<mosaic_0001>
module attributes {stable_mosaic.version = 11 : i64} {
  func.func @fused_kernel(%arg0: memref<40x2048xf32, #tpu.memory_space<vmem>>, %arg1: memref<8x2048xf32, #tpu.memory_space<vmem>>, %arg2: memref<32x40xf32, #tpu.memory_space<vmem>>, %arg3: memref<128x256xf32, #tpu.memory_space<vmem>>, %arg4: memref<1x256xf32, #tpu.memory_space<vmem>>, %arg5: memref<256x128xf32, #tpu.memory_space<vmem>>, %arg6: memref<1x128xf32, #tpu.memory_space<vmem>>, %arg7: memref<128x128xf32, #tpu.memory_space<vmem>>, %arg8: memref<1x128xf32, #tpu.memory_space<vmem>>, %arg9: memref<2x128xf32, #tpu.memory_space<vmem>>) attributes {dimension_semantics = [], scalar_prefetch = 0 : i64, scratch_operands = 0 : i64, tpu.core_type = #tpu.core_type<tc>} {
    %c0 = arith.constant 0 : index
    %c0_0 = arith.constant 0 : index
    %0 = vector.load %arg2[%c0, %c0_0] : memref<32x40xf32, #tpu.memory_space<vmem>>, vector<32x40xf32>
    %c0_1 = arith.constant 0 : index
    %c0_2 = arith.constant 0 : index
    %1 = vector.load %arg0[%c0_1, %c0_2] : memref<40x2048xf32, #tpu.memory_space<vmem>>, vector<40x2048xf32>
    %cst = arith.constant dense<0.000000e+00> : vector<32x2048xf32>
    %2 = tpu.matmul %0, %1, %cst {dimension_numbers = #tpu.dot_dimension_numbers<[1], [0], [0], [1], [0, 0, 1, 1], [], []>} : vector<32x40xf32>, vector<40x2048xf32>, vector<32x2048xf32> -> vector<32x2048xf32>
    %cst_3 = arith.constant 0.000000e+00 : f32
    %3 = vector.broadcast %cst_3 : f32 to vector<32x2048xf32>
    %4 = arith.maximumf %2, %3 : vector<32x2048xf32>
    %c0_4 = arith.constant 0 : index
    %c0_5 = arith.constant 0 : index
    %5 = vector.load %arg1[%c0_4, %c0_5] : memref<8x2048xf32, #tpu.memory_space<vmem>>, vector<8x2048xf32>
    %cst_6 = arith.constant dense<0.000000e+00> : vector<8x32xf32>
    %6 = tpu.matmul %5, %4, %cst_6 {dimension_numbers = #tpu.dot_dimension_numbers<[1], [1], [0], [0], [0, 0, 1, 0], [], []>} : vector<8x2048xf32>, vector<32x2048xf32>, vector<8x32xf32> -> vector<8x32xf32>
    %cst_7 = arith.constant 0.000000e+00 : f32
    %7 = vector.broadcast %cst_7 : f32 to vector<2x256xf32>
    %8 = vector.extract_strided_slice %6 {offsets = [0, 0], sizes = [2, 32], strides = [1, 1]} : vector<8x32xf32> to vector<2x32xf32>
    %c0_8 = arith.constant 0 : index
    %c0_9 = arith.constant 0 : index
    %9 = vector.load %arg3[%c0_8, %c0_9] : memref<128x256xf32, #tpu.memory_space<vmem>>, vector<32x256xf32>
    %cst_10 = arith.constant dense<0.000000e+00> : vector<2x256xf32>
    %10 = tpu.matmul %8, %9, %cst_10 {dimension_numbers = #tpu.dot_dimension_numbers<[1], [0], [0], [1], [0, 0, 1, 1], [], []>} : vector<2x32xf32>, vector<32x256xf32>, vector<2x256xf32> -> vector<2x256xf32>
    %11 = arith.addf %7, %10 : vector<2x256xf32>
    %12 = vector.extract_strided_slice %6 {offsets = [2, 0], sizes = [2, 32], strides = [1, 1]} : vector<8x32xf32> to vector<2x32xf32>
    %c32 = arith.constant 32 : index
    %c0_11 = arith.constant 0 : index
    %13 = vector.load %arg3[%c32, %c0_11] : memref<128x256xf32, #tpu.memory_space<vmem>>, vector<32x256xf32>
    %cst_12 = arith.constant dense<0.000000e+00> : vector<2x256xf32>
    %14 = tpu.matmul %12, %13, %cst_12 {dimension_numbers = #tpu.dot_dimension_numbers<[1], [0], [0], [1], [0, 0, 1, 1], [], []>} : vector<2x32xf32>, vector<32x256xf32>, vector<2x256xf32> -> vector<2x256xf32>
    %15 = arith.addf %11, %14 : vector<2x256xf32>
    %16 = vector.extract_strided_slice %6 {offsets = [4, 0], sizes = [2, 32], strides = [1, 1]} : vector<8x32xf32> to vector<2x32xf32>
    %c64 = arith.constant 64 : index
    %c0_13 = arith.constant 0 : index
    %17 = vector.load %arg3[%c64, %c0_13] : memref<128x256xf32, #tpu.memory_space<vmem>>, vector<32x256xf32>
    %cst_14 = arith.constant dense<0.000000e+00> : vector<2x256xf32>
    %18 = tpu.matmul %16, %17, %cst_14 {dimension_numbers = #tpu.dot_dimension_numbers<[1], [0], [0], [1], [0, 0, 1, 1], [], []>} : vector<2x32xf32>, vector<32x256xf32>, vector<2x256xf32> -> vector<2x256xf32>
    %19 = arith.addf %15, %18 : vector<2x256xf32>
    %20 = vector.extract_strided_slice %6 {offsets = [6, 0], sizes = [2, 32], strides = [1, 1]} : vector<8x32xf32> to vector<2x32xf32>
    %c96 = arith.constant 96 : index
    %c0_15 = arith.constant 0 : index
    %21 = vector.load %arg3[%c96, %c0_15] : memref<128x256xf32, #tpu.memory_space<vmem>>, vector<32x256xf32>
    %cst_16 = arith.constant dense<0.000000e+00> : vector<2x256xf32>
    %22 = tpu.matmul %20, %21, %cst_16 {dimension_numbers = #tpu.dot_dimension_numbers<[1], [0], [0], [1], [0, 0, 1, 1], [], []>} : vector<2x32xf32>, vector<32x256xf32>, vector<2x256xf32> -> vector<2x256xf32>
    %23 = arith.addf %19, %22 : vector<2x256xf32>
    %c0_17 = arith.constant 0 : index
    %c0_18 = arith.constant 0 : index
    %24 = vector.load %arg4[%c0_17, %c0_18] : memref<1x256xf32, #tpu.memory_space<vmem>>, vector<1x256xf32>
    %25 = vector.broadcast %24 : vector<1x256xf32> to vector<2x256xf32>
    %26 = arith.addf %23, %25 : vector<2x256xf32>
    %cst_19 = arith.constant 0.000000e+00 : f32
    %27 = vector.broadcast %cst_19 : f32 to vector<2x256xf32>
    %28 = arith.maximumf %26, %27 : vector<2x256xf32>
    %c0_20 = arith.constant 0 : index
    %c0_21 = arith.constant 0 : index
    %29 = vector.load %arg5[%c0_20, %c0_21] : memref<256x128xf32, #tpu.memory_space<vmem>>, vector<256x128xf32>
    %cst_22 = arith.constant dense<0.000000e+00> : vector<2x128xf32>
    %30 = tpu.matmul %28, %29, %cst_22 {dimension_numbers = #tpu.dot_dimension_numbers<[1], [0], [0], [1], [0, 0, 1, 1], [], []>} : vector<2x256xf32>, vector<256x128xf32>, vector<2x128xf32> -> vector<2x128xf32>
    %c0_23 = arith.constant 0 : index
    %c0_24 = arith.constant 0 : index
    %31 = vector.load %arg6[%c0_23, %c0_24] : memref<1x128xf32, #tpu.memory_space<vmem>>, vector<1x128xf32>
    %32 = vector.broadcast %31 : vector<1x128xf32> to vector<2x128xf32>
    %33 = arith.addf %30, %32 : vector<2x128xf32>
    %cst_25 = arith.constant 0.000000e+00 : f32
    %34 = vector.broadcast %cst_25 : f32 to vector<2x128xf32>
    %35 = arith.maximumf %33, %34 : vector<2x128xf32>
    %c0_26 = arith.constant 0 : index
    %c0_27 = arith.constant 0 : index
    %36 = vector.load %arg7[%c0_26, %c0_27] : memref<128x128xf32, #tpu.memory_space<vmem>>, vector<128x128xf32>
    %cst_28 = arith.constant dense<0.000000e+00> : vector<2x128xf32>
    %37 = tpu.matmul %35, %36, %cst_28 {dimension_numbers = #tpu.dot_dimension_numbers<[1], [0], [0], [1], [0, 0, 1, 1], [], []>} : vector<2x128xf32>, vector<128x128xf32>, vector<2x128xf32> -> vector<2x128xf32>
    %c0_29 = arith.constant 0 : index
    %c0_30 = arith.constant 0 : index
    %38 = vector.load %arg8[%c0_29, %c0_30] : memref<1x128xf32, #tpu.memory_space<vmem>>, vector<1x128xf32>
    %39 = vector.broadcast %38 : vector<1x128xf32> to vector<2x128xf32>
    %40 = arith.addf %37, %39 : vector<2x128xf32>
    %c0_31 = arith.constant 0 : index
    %c0_32 = arith.constant 0 : index
    %41 = vector.load %arg9[%c0_31, %c0_32] : memref<2x128xf32, #tpu.memory_space<vmem>>, vector<2x128xf32>
    tpu.vector_store %arg9[%c0_31, %c0_32], %40 {strides = array<i32>} : memref<2x128xf32, #tpu.memory_space<vmem>>, vector<2x128xf32>,
    return
  }
}

</mosaic_0001>

<llo_original>
// kernel: second_stage_forward.1
$region0: #{second_stage_forward.1}
  #allocation0 [shape = 'u32[]', space=smem, size = 0x4, offset = 0x4, fixed_abs, tag = 'smem constant byte address 0x4 - core index']
  #allocation1 [shape = 'u32[72,128]{1,0:T(1,128)}', space=vmem, size = 0x9000, scoped, tag = 'internal scratch']
  %s0 = inlined_call_operand.vmem [shape: f32[40,2048], index: 0, kind: input, shape index: {}]
  %s1 = inlined_call_operand.vmem [shape: f32[8,2048], index: 1, kind: input, shape index: {}]
  %s2 = inlined_call_operand.vmem [shape: f32[32,40], index: 2, kind: input, shape index: {}]
  %s3 = inlined_call_operand.vmem [shape: f32[128,256], index: 3, kind: input, shape index: {}]
  %s4 = inlined_call_operand.vmem [shape: f32[1,256], index: 4, kind: input, shape index: {}]
  %s5 = inlined_call_operand.vmem [shape: f32[256,128], index: 5, kind: input, shape index: {}]
  %s6 = inlined_call_operand.vmem [shape: f32[1,128], index: 6, kind: input, shape index: {}]
  %s7 = inlined_call_operand.vmem [shape: f32[128,128], index: 7, kind: input, shape index: {}]
  %s8 = inlined_call_operand.vmem [shape: f32[1,128], index: 8, kind: input, shape index: {}]
  %s9 = inlined_call_operand.hbm [shape: f32[2,128], index: 9, kind: output, shape index: {}]
  %s10 = sld [smem:[#allocation0]]
  $region46: #{second_stage_forward.1} parent=0
    _
  %s12 = ssub.s32 1, %s10
  %s13 = scalar_select 0, %s12, %s10
  $region1: #{second_stage_forward.1} parent=0
    #allocation2 [shape = 'u8[1024]{0}', space=vmem, size = 0x400, scoped, tag = 'output window, operand 0, single buffered']
    #allocation3 [shape = 's32[1]{0}', space=sflag, size = 0x4, scoped, tag = 'scoped memory for second_stage_forward.1']
    %14 = vsyncpa [#allocation3], 0
    // Predicated region
    $region2: #{second_stage_forward.1} parent=1 // pred_check
      _
    $region3: #{second_stage_forward.1} parent=1 // pred_check_branch
      %16 = sbr.rel (0) target = $region5
    $region4: #{second_stage_forward.1} parent=1 // pred_region
      _
    $region5: #{second_stage_forward.1} parent=1 // pred_fallthru
      _
    // Predicated region
    $region6: #{second_stage_forward.1} parent=1 // pred_check
      _
    $region7: #{second_stage_forward.1} parent=1 // pred_check_branch
      %18 = sbr.rel (0) target = $region9
    $region8: #{second_stage_forward.1} parent=1 // pred_region
      _
    $region9: #{second_stage_forward.1} parent=1 // pred_fallthru
      _
    // Predicated region
    $region10: #{second_stage_forward.1} parent=1 // pred_check
      _
    $region11: #{second_stage_forward.1} parent=1 // pred_check_branch
      %20 = sbr.rel (0) target = $region13
    $region12: #{second_stage_forward.1} parent=1 // pred_region
      _
    $region13: #{second_stage_forward.1} parent=1 // pred_fallthru
      _
    // Predicated region
    $region14: #{second_stage_forward.1} parent=1 // pred_check
      _
    $region15: #{second_stage_forward.1} parent=1 // pred_check_branch
      %22 = sbr.rel (0) target = $region17
    $region16: #{second_stage_forward.1} parent=1 // pred_region
      _
    $region17: #{second_stage_forward.1} parent=1 // pred_fallthru
      _
    // Predicated region
    $region18: #{second_stage_forward.1} parent=1 // pred_check
      _
    $region19: #{second_stage_forward.1} parent=1 // pred_check_branch
      %24 = sbr.rel (0) target = $region21
    $region20: #{second_stage_forward.1} parent=1 // pred_region
      _
    $region21: #{second_stage_forward.1} parent=1 // pred_fallthru
      _
    // Predicated region
    $region22: #{second_stage_forward.1} parent=1 // pred_check
      _
    $region23: #{second_stage_forward.1} parent=1 // pred_check_branch
      %26 = sbr.rel (0) target = $region25
    $region24: #{second_stage_forward.1} parent=1 // pred_region
      _
    $region25: #{second_stage_forward.1} parent=1 // pred_fallthru
      _
    // Predicated region
    $region26: #{second_stage_forward.1} parent=1 // pred_check
      _
    $region27: #{second_stage_forward.1} parent=1 // pred_check_branch
      %28 = sbr.rel (0) target = $region29
    $region28: #{second_stage_forward.1} parent=1 // pred_region
      _
    $region29: #{second_stage_forward.1} parent=1 // pred_fallthru
      _
    // Predicated region
    $region30: #{second_stage_forward.1} parent=1 // pred_check
      _
    $region31: #{second_stage_forward.1} parent=1 // pred_check_branch
      %30 = sbr.rel (0) target = $region33
    $region32: #{second_stage_forward.1} parent=1 // pred_region
      _
    $region33: #{second_stage_forward.1} parent=1 // pred_fallthru
      _
    // Predicated region
    $region34: #{second_stage_forward.1} parent=1 // pred_check
      _
    $region35: #{second_stage_forward.1} parent=1 // pred_check_branch
      %32 = sbr.rel (0) target = $region37
    $region36: #{second_stage_forward.1} parent=1 // pred_region
      _
    $region37: #{second_stage_forward.1} parent=1 // pred_fallthru
      _
    %v33 = vld [vmem:[%s2] sm:$0xff]
    %v34 = vld [vmem:[%s2 + $0x8] sm:$0xff]
    %v35 = vld [vmem:[%s2 + $0x10] sm:$0xff]
    %v36 = vld [vmem:[%s2 + $0x18] sm:$0xff]
    %v37 = vld [vmem:[%s0] sm:$0xff]
    %v38 = vld [vmem:[%s0 + $0x8] sm:$0xff]
    %v39 = vld [vmem:[%s0 + $0x10] sm:$0xff]
    %v40 = vld [vmem:[%s0 + $0x18] sm:$0xff]
    %v41 = vld [vmem:[%s0 + $0x20] sm:$0xff]
    %v42 = vld [vmem:[%s0 + $0x28] sm:$0xff]
    %v43 = vld [vmem:[%s0 + $0x30] sm:$0xff]
    %v44 = vld [vmem:[%s0 + $0x38] sm:$0xff]
    %v45 = vld [vmem:[%s0 + $0x40] sm:$0xff]
    %v46 = vld [vmem:[%s0 + $0x48] sm:$0xff]
    %v47 = vld [vmem:[%s0 + $0x50] sm:$0xff]
    %v48 = vld [vmem:[%s0 + $0x58] sm:$0xff]
    %v49 = vld [vmem:[%s0 + $0x60] sm:$0xff]
    %v50 = vld [vmem:[%s0 + $0x68] sm:$0xff]
    %v51 = vld [vmem:[%s0 + $0x70] sm:$0xff]
    %v52 = vld [vmem:[%s0 + $0x78] sm:$0xff]
    %v53 = vld [vmem:[%s0 + $0x80] sm:$0xff]
    %v54 = vld [vmem:[%s0 + $0x88] sm:$0xff]
    %v55 = vld [vmem:[%s0 + $0x90] sm:$0xff]
    %v56 = vld [vmem:[%s0 + $0x98] sm:$0xff]
    %v57 = vld [vmem:[%s0 + $0xa0] sm:$0xff]
    %v58 = vld [vmem:[%s0 + $0xa8] sm:$0xff]
    %v59 = vld [vmem:[%s0 + $0xb0] sm:$0xff]
    %v60 = vld [vmem:[%s0 + $0xb8] sm:$0xff]
    %v61 = vld [vmem:[%s0 + $0xc0] sm:$0xff]
    %v62 = vld [vmem:[%s0 + $0xc8] sm:$0xff]
    %v63 = vld [vmem:[%s0 + $0xd0] sm:$0xff]
    %v64 = vld [vmem:[%s0 + $0xd8] sm:$0xff]
    %v65 = vld [vmem:[%s0 + $0xe0] sm:$0xff]
    %v66 = vld [vmem:[%s0 + $0xe8] sm:$0xff]
    %v67 = vld [vmem:[%s0 + $0xf0] sm:$0xff]
    %v68 = vld [vmem:[%s0 + $0xf8] sm:$0xff]
    %v69 = vld [vmem:[%s0 + $0x100] sm:$0xff]
    %v70 = vld [vmem:[%s0 + $0x108] sm:$0xff]
    %v71 = vld [vmem:[%s0 + $0x110] sm:$0xff]
    %v72 = vld [vmem:[%s0 + $0x118] sm:$0xff]
    %v73 = vld [vmem:[%s0 + $0x120] sm:$0xff]
    %v74 = vld [vmem:[%s0 + $0x128] sm:$0xff]
    %v75 = vld [vmem:[%s0 + $0x130] sm:$0xff]
    %v76 = vld [vmem:[%s0 + $0x138] sm:$0xff]
    %v77 = vld [vmem:[%s0 + $0x140] sm:$0xff]
    %v78 = vld [vmem:[%s0 + $0x148] sm:$0xff]
    %v79 = vld [vmem:[%s0 + $0x150] sm:$0xff]
    %v80 = vld [vmem:[%s0 + $0x158] sm:$0xff]
    %v81 = vld [vmem:[%s0 + $0x160] sm:$0xff]
    %v82 = vld [vmem:[%s0 + $0x168] sm:$0xff]
    %v83 = vld [vmem:[%s0 + $0x170] sm:$0xff]
    %v84 = vld [vmem:[%s0 + $0x178] sm:$0xff]
    %v85 = vld [vmem:[%s0 + $0x180] sm:$0xff]
    %v86 = vld [vmem:[%s0 + $0x188] sm:$0xff]
    %v87 = vld [vmem:[%s0 + $0x190] sm:$0xff]
    %v88 = vld [vmem:[%s0 + $0x198] sm:$0xff]
    %v89 = vld [vmem:[%s0 + $0x1a0] sm:$0xff]
    %v90 = vld [vmem:[%s0 + $0x1a8] sm:$0xff]
    %v91 = vld [vmem:[%s0 + $0x1b0] sm:$0xff]
    %v92 = vld [vmem:[%s0 + $0x1b8] sm:$0xff]
    %v93 = vld [vmem:[%s0 + $0x1c0] sm:$0xff]
    %v94 = vld [vmem:[%s0 + $0x1c8] sm:$0xff]
    %v95 = vld [vmem:[%s0 + $0x1d0] sm:$0xff]
    %v96 = vld [vmem:[%s0 + $0x1d8] sm:$0xff]
    %v97 = vld [vmem:[%s0 + $0x1e0] sm:$0xff]
    %v98 = vld [vmem:[%s0 + $0x1e8] sm:$0xff]
    %v99 = vld [vmem:[%s0 + $0x1f0] sm:$0xff]
    %v100 = vld [vmem:[%s0 + $0x1f8] sm:$0xff]
    %v101 = vld [vmem:[%s0 + $0x200] sm:$0xff]
    %v102 = vld [vmem:[%s0 + $0x208] sm:$0xff]
    %v103 = vld [vmem:[%s0 + $0x210] sm:$0xff]
    %v104 = vld [vmem:[%s0 + $0x218] sm:$0xff]
    %v105 = vld [vmem:[%s0 + $0x220] sm:$0xff]
    %v106 = vld [vmem:[%s0 + $0x228] sm:$0xff]
    %v107 = vld [vmem:[%s0 + $0x230] sm:$0xff]
    %v108 = vld [vmem:[%s0 + $0x238] sm:$0xff]
    %v109 = vld [vmem:[%s0 + $0x240] sm:$0xff]
    %v110 = vld [vmem:[%s0 + $0x248] sm:$0xff]
    %v111 = vld [vmem:[%s0 + $0x250] sm:$0xff]
    %v112 = vld [vmem:[%s0 + $0x258] sm:$0xff]
    %v113 = vld [vmem:[%s0 + $0x260] sm:$0xff]
    %v114 = vld [vmem:[%s0 + $0x268] sm:$0xff]
    %v115 = vld [vmem:[%s0 + $0x270] sm:$0xff]
    %v116 = vld [vmem:[%s0 + $0x278] sm:$0xff]
    %vm117 = vcmask 326656
    %v119 = vsel %vm117, %v33, 0
    %v122 = vsel %vm117, %v34, 0
    %v125 = vsel %vm117, %v35, 0
    %v128 = vsel %vm117, %v36, 0
    %130 = vmatpush.msra.mxu0 0.0
    %131 = vmatpush.msra.mxu0 0.0
    %132 = vmatpush.msra.mxu0 0.0
    %133 = vmatpush.msra.mxu0 0.0
    %134 = vmatpush.msra.mxu0 0.0
    %135 = vmatpush.msra.mxu0 0.0
    %136 = vmatpush.msra.mxu0 0.0
    %137 = vmatpush.msra.mxu0 0.0
    %138 = vmatpush.msra.mxu0 0.0
    %139 = vmatpush.msra.mxu0 0.0
    %140 = vmatpush.msra.mxu0 0.0
    %141 = vmatpush.msra.mxu0 %v101
    %142 = vmatpush.msra.mxu0 %v85
    %143 = vmatpush.msra.mxu0 %v69
    %144 = vmatpush.msra.mxu0 %v53
    %145 = vmatpush.msra.mxu0 %v37
    %146 = vmatmul.f32.gmra.mxu0 %v119
    %v147 = vpop.f32.mrf.mxu0
    %v148 = vadd.f32 0.0, %v147
    %149 = vmatmul.f32.gmra.mxu0 %v122
    %v150 = vpop.f32.mrf.mxu0
    %v151 = vadd.f32 0.0, %v150
    %152 = vmatmul.f32.gmra.mxu0 %v125
    %v153 = vpop.f32.mrf.mxu0
    %v154 = vadd.f32 0.0, %v153
    %155 = vmatmul.f32.gmra.mxu0 %v128
    %v156 = vpop.f32.mrf.mxu0
    %v157 = vadd.f32 0.0, %v156
    %158 = vdwg.mxu0
    %159 = vmatpush.msra.mxu0 0.0
    %160 = vmatpush.msra.mxu0 0.0
    %161 = vmatpush.msra.mxu0 0.0
    %162 = vmatpush.msra.mxu0 0.0
    %163 = vmatpush.msra.mxu0 0.0
    %164 = vmatpush.msra.mxu0 0.0
    %165 = vmatpush.msra.mxu0 0.0
    %166 = vmatpush.msra.mxu0 0.0
    %167 = vmatpush.msra.mxu0 0.0
    %168 = vmatpush.msra.mxu0 0.0
    %169 = vmatpush.msra.mxu0 0.0
    %170 = vmatpush.msra.mxu0 %v102
    %171 = vmatpush.msra.mxu0 %v86
    %172 = vmatpush.msra.mxu0 %v70
    %173 = vmatpush.msra.mxu0 %v54
    %174 = vmatpush.msra.mxu0 %v38
    %175 = vmatmul.f32.gmra.mxu0 %v119
    %v176 = vpop.f32.mrf.mxu0
    %v177 = vadd.f32 0.0, %v176
    %178 = vmatmul.f32.gmra.mxu0 %v122
    %v179 = vpop.f32.mrf.mxu0
    %v180 = vadd.f32 0.0, %v179
    %181 = vmatmul.f32.gmra.mxu0 %v125
    %v182 = vpop.f32.mrf.mxu0
    %v183 = vadd.f32 0.0, %v182
    %184 = vmatmul.f32.gmra.mxu0 %v128
    %v185 = vpop.f32.mrf.mxu0
    %v186 = vadd.f32 0.0, %v185
    %187 = vdwg.mxu0
    %188 = vmatpush.msra.mxu0 0.0
    %189 = vmatpush.msra.mxu0 0.0
    %190 = vmatpush.msra.mxu0 0.0
    %191 = vmatpush.msra.mxu0 0.0
    %192 = vmatpush.msra.mxu0 0.0
    %193 = vmatpush.msra.mxu0 0.0
    %194 = vmatpush.msra.mxu0 0.0
    %195 = vmatpush.msra.mxu0 0.0
    %196 = vmatpush.msra.mxu0 0.0
    %197 = vmatpush.msra.mxu0 0.0
    %198 = vmatpush.msra.mxu0 0.0
    %199 = vmatpush.msra.mxu0 %v103
    %200 = vmatpush.msra.mxu0 %v87
    %201 = vmatpush.msra.mxu0 %v71
    %202 = vmatpush.msra.mxu0 %v55
    %203 = vmatpush.msra.mxu0 %v39
    %204 = vmatmul.f32.gmra.mxu0 %v119
    %v205 = vpop.f32.mrf.mxu0
    %v206 = vadd.f32 0.0, %v205
    %207 = vmatmul.f32.gmra.mxu0 %v122
    %v208 = vpop.f32.mrf.mxu0
    %v209 = vadd.f32 0.0, %v208
    %210 = vmatmul.f32.gmra.mxu0 %v125
    %v211 = vpop.f32.mrf.mxu0
    %v212 = vadd.f32 0.0, %v211
    %213 = vmatmul.f32.gmra.mxu0 %v128
    %v214 = vpop.f32.mrf.mxu0
    %v215 = vadd.f32 0.0, %v214
    %216 = vdwg.mxu0
    %217 = vmatpush.msra.mxu0 0.0
    %218 = vmatpush.msra.mxu0 0.0
    %219 = vmatpush.msra.mxu0 0.0
    %220 = vmatpush.msra.mxu0 0.0
    %221 = vmatpush.msra.mxu0 0.0
    %222 = vmatpush.msra.mxu0 0.0
    %223 = vmatpush.msra.mxu0 0.0
    %224 = vmatpush.msra.mxu0 0.0
    %225 = vmatpush.msra.mxu0 0.0
    %226 = vmatpush.msra.mxu0 0.0
    %227 = vmatpush.msra.mxu0 0.0
    %228 = vmatpush.msra.mxu0 %v104
    %229 = vmatpush.msra.mxu0 %v88
    %230 = vmatpush.msra.mxu0 %v72
    %231 = vmatpush.msra.mxu0 %v56
    %232 = vmatpush.msra.mxu0 %v40
    %233 = vmatmul.f32.gmra.mxu0 %v119
    %v234 = vpop.f32.mrf.mxu0
    %v235 = vadd.f32 0.0, %v234
    %236 = vmatmul.f32.gmra.mxu0 %v122
    %v237 = vpop.f32.mrf.mxu0
    %v238 = vadd.f32 0.0, %v237
    %239 = vmatmul.f32.gmra.mxu0 %v125
    %v240 = vpop.f32.mrf.mxu0
    %v241 = vadd.f32 0.0, %v240
    %242 = vmatmul.f32.gmra.mxu0 %v128
    %v243 = vpop.f32.mrf.mxu0
    %v244 = vadd.f32 0.0, %v243
    %245 = vdwg.mxu0
    %246 = vmatpush.msra.mxu0 0.0
    %247 = vmatpush.msra.mxu0 0.0
    %248 = vmatpush.msra.mxu0 0.0
    %249 = vmatpush.msra.mxu0 0.0
    %250 = vmatpush.msra.mxu0 0.0
    %251 = vmatpush.msra.mxu0 0.0
    %252 = vmatpush.msra.mxu0 0.0
    %253 = vmatpush.msra.mxu0 0.0
    %254 = vmatpush.msra.mxu0 0.0
    %255 = vmatpush.msra.mxu0 0.0
    %256 = vmatpush.msra.mxu0 0.0
    %257 = vmatpush.msra.mxu0 %v105
    %258 = vmatpush.msra.mxu0 %v89
    %259 = vmatpush.msra.mxu0 %v73
    %260 = vmatpush.msra.mxu0 %v57
    %261 = vmatpush.msra.mxu0 %v41
    %262 = vmatmul.f32.gmra.mxu0 %v119
    %v263 = vpop.f32.mrf.mxu0
    %v264 = vadd.f32 0.0, %v263
    %265 = vmatmul.f32.gmra.mxu0 %v122
    %v266 = vpop.f32.mrf.mxu0
    %v267 = vadd.f32 0.0, %v266
    %268 = vmatmul.f32.gmra.mxu0 %v125
    %v269 = vpop.f32.mrf.mxu0
    %v270 = vadd.f32 0.0, %v269
    %271 = vmatmul.f32.gmra.mxu0 %v128
    %v272 = vpop.f32.mrf.mxu0
    %v273 = vadd.f32 0.0, %v272
    %274 = vdwg.mxu0
    %275 = vmatpush.msra.mxu0 0.0
    %276 = vmatpush.msra.mxu0 0.0
    %277 = vmatpush.msra.mxu0 0.0
    %278 = vmatpush.msra.mxu0 0.0
    %279 = vmatpush.msra.mxu0 0.0
    %280 = vmatpush.msra.mxu0 0.0
    %281 = vmatpush.msra.mxu0 0.0
    %282 = vmatpush.msra.mxu0 0.0
    %283 = vmatpush.msra.mxu0 0.0
    %284 = vmatpush.msra.mxu0 0.0
    %285 = vmatpush.msra.mxu0 0.0
    %286 = vmatpush.msra.mxu0 %v106
    %287 = vmatpush.msra.mxu0 %v90
    %288 = vmatpush.msra.mxu0 %v74
    %289 = vmatpush.msra.mxu0 %v58
    %290 = vmatpush.msra.mxu0 %v42
    %291 = vmatmul.f32.gmra.mxu0 %v119
    %v292 = vpop.f32.mrf.mxu0
    %v293 = vadd.f32 0.0, %v292
    %294 = vmatmul.f32.gmra.mxu0 %v122
    %v295 = vpop.f32.mrf.mxu0
    %v296 = vadd.f32 0.0, %v295
    %297 = vmatmul.f32.gmra.mxu0 %v125
    %v298 = vpop.f32.mrf.mxu0
    %v299 = vadd.f32 0.0, %v298
    %300 = vmatmul.f32.gmra.mxu0 %v128
    %v301 = vpop.f32.mrf.mxu0
    %v302 = vadd.f32 0.0, %v301
    %303 = vdwg.mxu0
    %304 = vmatpush.msra.mxu0 0.0
    %305 = vmatpush.msra.mxu0 0.0
    %306 = vmatpush.msra.mxu0 0.0
    %307 = vmatpush.msra.mxu0 0.0
    %308 = vmatpush.msra.mxu0 0.0
    %309 = vmatpush.msra.mxu0 0.0
    %310 = vmatpush.msra.mxu0 0.0
    %311 = vmatpush.msra.mxu0 0.0
    %312 = vmatpush.msra.mxu0 0.0
    %313 = vmatpush.msra.mxu0 0.0
    %314 = vmatpush.msra.mxu0 0.0
    %315 = vmatpush.msra.mxu0 %v107
    %316 = vmatpush.msra.mxu0 %v91
    %317 = vmatpush.msra.mxu0 %v75
    %318 = vmatpush.msra.mxu0 %v59
    %319 = vmatpush.msra.mxu0 %v43
    %320 = vmatmul.f32.gmra.mxu0 %v119
    %v321 = vpop.f32.mrf.mxu0
    %v322 = vadd.f32 0.0, %v321
    %323 = vmatmul.f32.gmra.mxu0 %v122
    %v324 = vpop.f32.mrf.mxu0
    %v325 = vadd.f32 0.0, %v324
    %326 = vmatmul.f32.gmra.mxu0 %v125
    %v327 = vpop.f32.mrf.mxu0
    %v328 = vadd.f32 0.0, %v327
    %329 = vmatmul.f32.gmra.mxu0 %v128
    %v330 = vpop.f32.mrf.mxu0
    %v331 = vadd.f32 0.0, %v330
    %332 = vdwg.mxu0
    %333 = vmatpush.msra.mxu0 0.0
    %334 = vmatpush.msra.mxu0 0.0
    %335 = vmatpush.msra.mxu0 0.0
    %336 = vmatpush.msra.mxu0 0.0
    %337 = vmatpush.msra.mxu0 0.0
    %338 = vmatpush.msra.mxu0 0.0
    %339 = vmatpush.msra.mxu0 0.0
    %340 = vmatpush.msra.mxu0 0.0
    %341 = vmatpush.msra.mxu0 0.0
    %342 = vmatpush.msra.mxu0 0.0
    %343 = vmatpush.msra.mxu0 0.0
    %344 = vmatpush.msra.mxu0 %v108
    %345 = vmatpush.msra.mxu0 %v92
    %346 = vmatpush.msra.mxu0 %v76
    %347 = vmatpush.msra.mxu0 %v60
    %348 = vmatpush.msra.mxu0 %v44
    %349 = vmatmul.f32.gmra.mxu0 %v119
    %v350 = vpop.f32.mrf.mxu0
    %v351 = vadd.f32 0.0, %v350
    %352 = vmatmul.f32.gmra.mxu0 %v122
    %v353 = vpop.f32.mrf.mxu0
    %v354 = vadd.f32 0.0, %v353
    %355 = vmatmul.f32.gmra.mxu0 %v125
    %v356 = vpop.f32.mrf.mxu0
    %v357 = vadd.f32 0.0, %v356
    %358 = vmatmul.f32.gmra.mxu0 %v128
    %v359 = vpop.f32.mrf.mxu0
    %v360 = vadd.f32 0.0, %v359
    %361 = vdwg.mxu0
    %362 = vmatpush.msra.mxu0 0.0
    %363 = vmatpush.msra.mxu0 0.0
    %364 = vmatpush.msra.mxu0 0.0
    %365 = vmatpush.msra.mxu0 0.0
    %366 = vmatpush.msra.mxu0 0.0
    %367 = vmatpush.msra.mxu0 0.0
    %368 = vmatpush.msra.mxu0 0.0
    %369 = vmatpush.msra.mxu0 0.0
    %370 = vmatpush.msra.mxu0 0.0
    %371 = vmatpush.msra.mxu0 0.0
    %372 = vmatpush.msra.mxu0 0.0
    %373 = vmatpush.msra.mxu0 %v109
    %374 = vmatpush.msra.mxu0 %v93
    %375 = vmatpush.msra.mxu0 %v77
    %376 = vmatpush.msra.mxu0 %v61
    %377 = vmatpush.msra.mxu0 %v45
    %378 = vmatmul.f32.gmra.mxu0 %v119
    %v379 = vpop.f32.mrf.mxu0
    %v380 = vadd.f32 0.0, %v379
    %381 = vmatmul.f32.gmra.mxu0 %v122
    %v382 = vpop.f32.mrf.mxu0
    %v383 = vadd.f32 0.0, %v382
    %384 = vmatmul.f32.gmra.mxu0 %v125
    %v385 = vpop.f32.mrf.mxu0
    %v386 = vadd.f32 0.0, %v385
    %387 = vmatmul.f32.gmra.mxu0 %v128
    %v388 = vpop.f32.mrf.mxu0
    %v389 = vadd.f32 0.0, %v388
    %390 = vdwg.mxu0
    %391 = vmatpush.msra.mxu0 0.0
    %392 = vmatpush.msra.mxu0 0.0
    %393 = vmatpush.msra.mxu0 0.0
    %394 = vmatpush.msra.mxu0 0.0
    %395 = vmatpush.msra.mxu0 0.0
    %396 = vmatpush.msra.mxu0 0.0
    %397 = vmatpush.msra.mxu0 0.0
    %398 = vmatpush.msra.mxu0 0.0
    %399 = vmatpush.msra.mxu0 0.0
    %400 = vmatpush.msra.mxu0 0.0
    %401 = vmatpush.msra.mxu0 0.0
    %402 = vmatpush.msra.mxu0 %v110
    %403 = vmatpush.msra.mxu0 %v94
    %404 = vmatpush.msra.mxu0 %v78
    %405 = vmatpush.msra.mxu0 %v62
    %406 = vmatpush.msra.mxu0 %v46
    %407 = vmatmul.f32.gmra.mxu0 %v119
    %v408 = vpop.f32.mrf.mxu0
    %v409 = vadd.f32 0.0, %v408
    %410 = vmatmul.f32.gmra.mxu0 %v122
    %v411 = vpop.f32.mrf.mxu0
    %v412 = vadd.f32 0.0, %v411
    %413 = vmatmul.f32.gmra.mxu0 %v125
    %v414 = vpop.f32.mrf.mxu0
    %v415 = vadd.f32 0.0, %v414
    %416 = vmatmul.f32.gmra.mxu0 %v128
    %v417 = vpop.f32.mrf.mxu0
    %v418 = vadd.f32 0.0, %v417
    %419 = vdwg.mxu0
    %420 = vmatpush.msra.mxu0 0.0
    %421 = vmatpush.msra.mxu0 0.0
    %422 = vmatpush.msra.mxu0 0.0
    %423 = vmatpush.msra.mxu0 0.0
    %424 = vmatpush.msra.mxu0 0.0
    %425 = vmatpush.msra.mxu0 0.0
    %426 = vmatpush.msra.mxu0 0.0
    %427 = vmatpush.msra.mxu0 0.0
    %428 = vmatpush.msra.mxu0 0.0
    %429 = vmatpush.msra.mxu0 0.0
    %430 = vmatpush.msra.mxu0 0.0
    %431 = vmatpush.msra.mxu0 %v111
    %432 = vmatpush.msra.mxu0 %v95
    %433 = vmatpush.msra.mxu0 %v79
    %434 = vmatpush.msra.mxu0 %v63
    %435 = vmatpush.msra.mxu0 %v47
    %436 = vmatmul.f32.gmra.mxu0 %v119
    %v437 = vpop.f32.mrf.mxu0
    %v438 = vadd.f32 0.0, %v437
    %439 = vmatmul.f32.gmra.mxu0 %v122
    %v440 = vpop.f32.mrf.mxu0
    %v441 = vadd.f32 0.0, %v440
    %442 = vmatmul.f32.gmra.mxu0 %v125
    %v443 = vpop.f32.mrf.mxu0
    %v444 = vadd.f32 0.0, %v443
    %445 = vmatmul.f32.gmra.mxu0 %v128
    %v446 = vpop.f32.mrf.mxu0
    %v447 = vadd.f32 0.0, %v446
    %448 = vdwg.mxu0
    %449 = vmatpush.msra.mxu0 0.0
    %450 = vmatpush.msra.mxu0 0.0
    %451 = vmatpush.msra.mxu0 0.0
    %452 = vmatpush.msra.mxu0 0.0
    %453 = vmatpush.msra.mxu0 0.0
    %454 = vmatpush.msra.mxu0 0.0
    %455 = vmatpush.msra.mxu0 0.0
    %456 = vmatpush.msra.mxu0 0.0
    %457 = vmatpush.msra.mxu0 0.0
    %458 = vmatpush.msra.mxu0 0.0
    %459 = vmatpush.msra.mxu0 0.0
    %460 = vmatpush.msra.mxu0 %v112
    %461 = vmatpush.msra.mxu0 %v96
    %462 = vmatpush.msra.mxu0 %v80
    %463 = vmatpush.msra.mxu0 %v64
    %464 = vmatpush.msra.mxu0 %v48
    %465 = vmatmul.f32.gmra.mxu0 %v119
    %v466 = vpop.f32.mrf.mxu0
    %v467 = vadd.f32 0.0, %v466
    %468 = vmatmul.f32.gmra.mxu0 %v122
    %v469 = vpop.f32.mrf.mxu0
    %v470 = vadd.f32 0.0, %v469
    %471 = vmatmul.f32.gmra.mxu0 %v125
    %v472 = vpop.f32.mrf.mxu0
    %v473 = vadd.f32 0.0, %v472
    %474 = vmatmul.f32.gmra.mxu0 %v128
    %v475 = vpop.f32.mrf.mxu0
    %v476 = vadd.f32 0.0, %v475
    %477 = vdwg.mxu0
    %478 = vmatpush.msra.mxu0 0.0
    %479 = vmatpush.msra.mxu0 0.0
    %480 = vmatpush.msra.mxu0 0.0
    %481 = vmatpush.msra.mxu0 0.0
    %482 = vmatpush.msra.mxu0 0.0
    %483 = vmatpush.msra.mxu0 0.0
    %484 = vmatpush.msra.mxu0 0.0
    %485 = vmatpush.msra.mxu0 0.0
    %486 = vmatpush.msra.mxu0 0.0
    %487 = vmatpush.msra.mxu0 0.0
    %488 = vmatpush.msra.mxu0 0.0
    %489 = vmatpush.msra.mxu0 %v113
    %490 = vmatpush.msra.mxu0 %v97
    %491 = vmatpush.msra.mxu0 %v81
    %492 = vmatpush.msra.mxu0 %v65
    %493 = vmatpush.msra.mxu0 %v49
    %494 = vmatmul.f32.gmra.mxu0 %v119
    %v495 = vpop.f32.mrf.mxu0
    %v496 = vadd.f32 0.0, %v495
    %497 = vmatmul.f32.gmra.mxu0 %v122
    %v498 = vpop.f32.mrf.mxu0
    %v499 = vadd.f32 0.0, %v498
    %500 = vmatmul.f32.gmra.mxu0 %v125
    %v501 = vpop.f32.mrf.mxu0
    %v502 = vadd.f32 0.0, %v501
    %503 = vmatmul.f32.gmra.mxu0 %v128
    %v504 = vpop.f32.mrf.mxu0
    %v505 = vadd.f32 0.0, %v504
    %506 = vdwg.mxu0
    %507 = vmatpush.msra.mxu0 0.0
    %508 = vmatpush.msra.mxu0 0.0
    %509 = vmatpush.msra.mxu0 0.0
    %510 = vmatpush.msra.mxu0 0.0
    %511 = vmatpush.msra.mxu0 0.0
    %512 = vmatpush.msra.mxu0 0.0
    %513 = vmatpush.msra.mxu0 0.0
    %514 = vmatpush.msra.mxu0 0.0
    %515 = vmatpush.msra.mxu0 0.0
    %516 = vmatpush.msra.mxu0 0.0
    %517 = vmatpush.msra.mxu0 0.0
    %518 = vmatpush.msra.mxu0 %v114
    %519 = vmatpush.msra.mxu0 %v98
    %520 = vmatpush.msra.mxu0 %v82
    %521 = vmatpush.msra.mxu0 %v66
    %522 = vmatpush.msra.mxu0 %v50
    %523 = vmatmul.f32.gmra.mxu0 %v119
    %v524 = vpop.f32.mrf.mxu0
    %v525 = vadd.f32 0.0, %v524
    %526 = vmatmul.f32.gmra.mxu0 %v122
    %v527 = vpop.f32.mrf.mxu0
    %v528 = vadd.f32 0.0, %v527
    %529 = vmatmul.f32.gmra.mxu0 %v125
    %v530 = vpop.f32.mrf.mxu0
    %v531 = vadd.f32 0.0, %v530
    %532 = vmatmul.f32.gmra.mxu0 %v128
    %v533 = vpop.f32.mrf.mxu0
    %v534 = vadd.f32 0.0, %v533
    %535 = vdwg.mxu0
    %536 = vmatpush.msra.mxu0 0.0
    %537 = vmatpush.msra.mxu0 0.0
    %538 = vmatpush.msra.mxu0 0.0
    %539 = vmatpush.msra.mxu0 0.0
    %540 = vmatpush.msra.mxu0 0.0
    %541 = vmatpush.msra.mxu0 0.0
    %542 = vmatpush.msra.mxu0 0.0
    %543 = vmatpush.msra.mxu0 0.0
    %544 = vmatpush.msra.mxu0 0.0
    %545 = vmatpush.msra.mxu0 0.0
    %546 = vmatpush.msra.mxu0 0.0
    %547 = vmatpush.msra.mxu0 %v115
    %548 = vmatpush.msra.mxu0 %v99
    %549 = vmatpush.msra.mxu0 %v83
    %550 = vmatpush.msra.mxu0 %v67
    %551 = vmatpush.msra.mxu0 %v51
    %552 = vmatmul.f32.gmra.mxu0 %v119
    %v553 = vpop.f32.mrf.mxu0
    %v554 = vadd.f32 0.0, %v553
    %555 = vmatmul.f32.gmra.mxu0 %v122
    %v556 = vpop.f32.mrf.mxu0
    %v557 = vadd.f32 0.0, %v556
    %558 = vmatmul.f32.gmra.mxu0 %v125
    %v559 = vpop.f32.mrf.mxu0
    %v560 = vadd.f32 0.0, %v559
    %561 = vmatmul.f32.gmra.mxu0 %v128
    %v562 = vpop.f32.mrf.mxu0
    %v563 = vadd.f32 0.0, %v562
    %564 = vdwg.mxu0
    %565 = vmatpush.msra.mxu0 0.0
    %566 = vmatpush.msra.mxu0 0.0
    %567 = vmatpush.msra.mxu0 0.0
    %568 = vmatpush.msra.mxu0 0.0
    %569 = vmatpush.msra.mxu0 0.0
    %570 = vmatpush.msra.mxu0 0.0
    %571 = vmatpush.msra.mxu0 0.0
    %572 = vmatpush.msra.mxu0 0.0
    %573 = vmatpush.msra.mxu0 0.0
    %574 = vmatpush.msra.mxu0 0.0
    %575 = vmatpush.msra.mxu0 0.0
    %576 = vmatpush.msra.mxu0 %v116
    %577 = vmatpush.msra.mxu0 %v100
    %578 = vmatpush.msra.mxu0 %v84
    %579 = vmatpush.msra.mxu0 %v68
    %580 = vmatpush.msra.mxu0 %v52
    %581 = vmatmul.f32.gmra.mxu0 %v119
    %v582 = vpop.f32.mrf.mxu0
    %v583 = vadd.f32 0.0, %v582
    %584 = vmatmul.f32.gmra.mxu0 %v122
    %v585 = vpop.f32.mrf.mxu0
    %v586 = vadd.f32 0.0, %v585
    %587 = vmatmul.f32.gmra.mxu0 %v125
    %v588 = vpop.f32.mrf.mxu0
    %v589 = vadd.f32 0.0, %v588
    %590 = vmatmul.f32.gmra.mxu0 %v128
    %v591 = vpop.f32.mrf.mxu0
    %v592 = vadd.f32 0.0, %v591
    %593 = vdwg.mxu0
    %v594 = vmax.f32 %v148, 0.0
    %v595 = vmax.f32 %v177, 0.0
    %v596 = vmax.f32 %v206, 0.0
    %v597 = vmax.f32 %v235, 0.0
    %v598 = vmax.f32 %v264, 0.0
    %v599 = vmax.f32 %v293, 0.0
    %v600 = vmax.f32 %v322, 0.0
    %v601 = vmax.f32 %v351, 0.0
    %v602 = vmax.f32 %v380, 0.0
    %v603 = vmax.f32 %v409, 0.0
    %v604 = vmax.f32 %v438, 0.0
    %v605 = vmax.f32 %v467, 0.0
    %v606 = vmax.f32 %v496, 0.0
    %v607 = vmax.f32 %v525, 0.0
    %v608 = vmax.f32 %v554, 0.0
    %v609 = vmax.f32 %v583, 0.0
    %v610 = vmax.f32 %v151, 0.0
    %v611 = vmax.f32 %v180, 0.0
    %v612 = vmax.f32 %v209, 0.0
    %v613 = vmax.f32 %v238, 0.0
    %v614 = vmax.f32 %v267, 0.0
    %v615 = vmax.f32 %v296, 0.0
    %v616 = vmax.f32 %v325, 0.0
    %v617 = vmax.f32 %v354, 0.0
    %v618 = vmax.f32 %v383, 0.0
    %v619 = vmax.f32 %v412, 0.0
    %v620 = vmax.f32 %v441, 0.0
    %v621 = vmax.f32 %v470, 0.0
    %v622 = vmax.f32 %v499, 0.0
    %v623 = vmax.f32 %v528, 0.0
    %v624 = vmax.f32 %v557, 0.0
    %v625 = vmax.f32 %v586, 0.0
    %v626 = vmax.f32 %v154, 0.0
    %v627 = vmax.f32 %v183, 0.0
    %v628 = vmax.f32 %v212, 0.0
    %v629 = vmax.f32 %v241, 0.0
    %v630 = vmax.f32 %v270, 0.0
    %v631 = vmax.f32 %v299, 0.0
    %v632 = vmax.f32 %v328, 0.0
    %v633 = vmax.f32 %v357, 0.0
    %v634 = vmax.f32 %v386, 0.0
    %v635 = vmax.f32 %v415, 0.0
    %v636 = vmax.f32 %v444, 0.0
    %v637 = vmax.f32 %v473, 0.0
    %v638 = vmax.f32 %v502, 0.0
    %v639 = vmax.f32 %v531, 0.0
    %v640 = vmax.f32 %v560, 0.0
    %v641 = vmax.f32 %v589, 0.0
    %v642 = vmax.f32 %v157, 0.0
    %v643 = vmax.f32 %v186, 0.0
    %v644 = vmax.f32 %v215, 0.0
    %v645 = vmax.f32 %v244, 0.0
    %v646 = vmax.f32 %v273, 0.0
    %v647 = vmax.f32 %v302, 0.0
    %v648 = vmax.f32 %v331, 0.0
    %v649 = vmax.f32 %v360, 0.0
    %v650 = vmax.f32 %v389, 0.0
    %v651 = vmax.f32 %v418, 0.0
    %v652 = vmax.f32 %v447, 0.0
    %v653 = vmax.f32 %v476, 0.0
    %v654 = vmax.f32 %v505, 0.0
    %v655 = vmax.f32 %v534, 0.0
    %v656 = vmax.f32 %v563, 0.0
    %v657 = vmax.f32 %v592, 0.0
    %v658 = vld [vmem:[%s1] sm:$0xff]
    %v659 = vld [vmem:[%s1 + $0x8] sm:$0xff]
    %v660 = vld [vmem:[%s1 + $0x10] sm:$0xff]
    %v661 = vld [vmem:[%s1 + $0x18] sm:$0xff]
    %v662 = vld [vmem:[%s1 + $0x20] sm:$0xff]
    %v663 = vld [vmem:[%s1 + $0x28] sm:$0xff]
    %v664 = vld [vmem:[%s1 + $0x30] sm:$0xff]
    %v665 = vld [vmem:[%s1 + $0x38] sm:$0xff]
    %v666 = vld [vmem:[%s1 + $0x40] sm:$0xff]
    %v667 = vld [vmem:[%s1 + $0x48] sm:$0xff]
    %v668 = vld [vmem:[%s1 + $0x50] sm:$0xff]
    %v669 = vld [vmem:[%s1 + $0x58] sm:$0xff]
    %v670 = vld [vmem:[%s1 + $0x60] sm:$0xff]
    %v671 = vld [vmem:[%s1 + $0x68] sm:$0xff]
    %v672 = vld [vmem:[%s1 + $0x70] sm:$0xff]
    %v673 = vld [vmem:[%s1 + $0x78] sm:$0xff]
    %674 = vmatpush.xpose.msra.mxu0 0.0
    %675 = vmatpush.xpose.msra.mxu0 0.0
    %676 = vmatpush.xpose.msra.mxu0 0.0
    %677 = vmatpush.xpose.msra.mxu0 0.0
    %678 = vmatpush.xpose.msra.mxu0 0.0
    %679 = vmatpush.xpose.msra.mxu0 0.0
    %680 = vmatpush.xpose.msra.mxu0 0.0
    %681 = vmatpush.xpose.msra.mxu0 0.0
    %682 = vmatpush.xpose.msra.mxu0 0.0
    %683 = vmatpush.xpose.msra.mxu0 0.0
    %684 = vmatpush.xpose.msra.mxu0 0.0
    %685 = vmatpush.xpose.msra.mxu0 0.0
    %686 = vmatpush.xpose.msra.mxu0 %v642
    %687 = vmatpush.xpose.msra.mxu0 %v626
    %688 = vmatpush.xpose.msra.mxu0 %v610
    %689 = vmatpush.xpose.msra.mxu0 %v594
    %690 = vmatmul.f32.gmra.mxu0 %v658
    %v691 = vpop.f32.mrf.mxu0
    %v692 = vadd.f32 0.0, %v691
    %693 = vdwg.mxu0
    %694 = vmatpush.xpose.msra.mxu0 0.0
    %695 = vmatpush.xpose.msra.mxu0 0.0
    %696 = vmatpush.xpose.msra.mxu0 0.0
    %697 = vmatpush.xpose.msra.mxu0 0.0
    %698 = vmatpush.xpose.msra.mxu0 0.0
    %699 = vmatpush.xpose.msra.mxu0 0.0
    %700 = vmatpush.xpose.msra.mxu0 0.0
    %701 = vmatpush.xpose.msra.mxu0 0.0
    %702 = vmatpush.xpose.msra.mxu0 0.0
    %703 = vmatpush.xpose.msra.mxu0 0.0
    %704 = vmatpush.xpose.msra.mxu0 0.0
    %705 = vmatpush.xpose.msra.mxu0 0.0
    %706 = vmatpush.xpose.msra.mxu0 %v643
    %707 = vmatpush.xpose.msra.mxu0 %v627
    %708 = vmatpush.xpose.msra.mxu0 %v611
    %709 = vmatpush.xpose.msra.mxu0 %v595
    %710 = vmatmul.f32.gmra.mxu0 %v659
    %v711 = vpop.f32.mrf.mxu0
    %v712 = vadd.f32 %v692, %v711
    %713 = vdwg.mxu0
    %714 = vmatpush.xpose.msra.mxu0 0.0
    %715 = vmatpush.xpose.msra.mxu0 0.0
    %716 = vmatpush.xpose.msra.mxu0 0.0
    %717 = vmatpush.xpose.msra.mxu0 0.0
    %718 = vmatpush.xpose.msra.mxu0 0.0
    %719 = vmatpush.xpose.msra.mxu0 0.0
    %720 = vmatpush.xpose.msra.mxu0 0.0
    %721 = vmatpush.xpose.msra.mxu0 0.0
    %722 = vmatpush.xpose.msra.mxu0 0.0
    %723 = vmatpush.xpose.msra.mxu0 0.0
    %724 = vmatpush.xpose.msra.mxu0 0.0
    %725 = vmatpush.xpose.msra.mxu0 0.0
    %726 = vmatpush.xpose.msra.mxu0 %v644
    %727 = vmatpush.xpose.msra.mxu0 %v628
    %728 = vmatpush.xpose.msra.mxu0 %v612
    %729 = vmatpush.xpose.msra.mxu0 %v596
    %730 = vmatmul.f32.gmra.mxu0 %v660
    %v731 = vpop.f32.mrf.mxu0
    %v732 = vadd.f32 %v712, %v731
    %733 = vdwg.mxu0
    %734 = vmatpush.xpose.msra.mxu0 0.0
    %735 = vmatpush.xpose.msra.mxu0 0.0
    %736 = vmatpush.xpose.msra.mxu0 0.0
    %737 = vmatpush.xpose.msra.mxu0 0.0
    %738 = vmatpush.xpose.msra.mxu0 0.0
    %739 = vmatpush.xpose.msra.mxu0 0.0
    %740 = vmatpush.xpose.msra.mxu0 0.0
    %741 = vmatpush.xpose.msra.mxu0 0.0
    %742 = vmatpush.xpose.msra.mxu0 0.0
    %743 = vmatpush.xpose.msra.mxu0 0.0
    %744 = vmatpush.xpose.msra.mxu0 0.0
    %745 = vmatpush.xpose.msra.mxu0 0.0
    %746 = vmatpush.xpose.msra.mxu0 %v645
    %747 = vmatpush.xpose.msra.mxu0 %v629
    %748 = vmatpush.xpose.msra.mxu0 %v613
    %749 = vmatpush.xpose.msra.mxu0 %v597
    %750 = vmatmul.f32.gmra.mxu0 %v661
    %v751 = vpop.f32.mrf.mxu0
    %v752 = vadd.f32 %v732, %v751
    %753 = vdwg.mxu0
    %754 = vmatpush.xpose.msra.mxu0 0.0
    %755 = vmatpush.xpose.msra.mxu0 0.0
    %756 = vmatpush.xpose.msra.mxu0 0.0
    %757 = vmatpush.xpose.msra.mxu0 0.0
    %758 = vmatpush.xpose.msra.mxu0 0.0
    %759 = vmatpush.xpose.msra.mxu0 0.0
    %760 = vmatpush.xpose.msra.mxu0 0.0
    %761 = vmatpush.xpose.msra.mxu0 0.0
    %762 = vmatpush.xpose.msra.mxu0 0.0
    %763 = vmatpush.xpose.msra.mxu0 0.0
    %764 = vmatpush.xpose.msra.mxu0 0.0
    %765 = vmatpush.xpose.msra.mxu0 0.0
    %766 = vmatpush.xpose.msra.mxu0 %v646
    %767 = vmatpush.xpose.msra.mxu0 %v630
    %768 = vmatpush.xpose.msra.mxu0 %v614
    %769 = vmatpush.xpose.msra.mxu0 %v598
    %770 = vmatmul.f32.gmra.mxu0 %v662
    %v771 = vpop.f32.mrf.mxu0
    %v772 = vadd.f32 %v752, %v771
    %773 = vdwg.mxu0
    %774 = vmatpush.xpose.msra.mxu0 0.0
    %775 = vmatpush.xpose.msra.mxu0 0.0
    %776 = vmatpush.xpose.msra.mxu0 0.0
    %777 = vmatpush.xpose.msra.mxu0 0.0
    %778 = vmatpush.xpose.msra.mxu0 0.0
    %779 = vmatpush.xpose.msra.mxu0 0.0
    %780 = vmatpush.xpose.msra.mxu0 0.0
    %781 = vmatpush.xpose.msra.mxu0 0.0
    %782 = vmatpush.xpose.msra.mxu0 0.0
    %783 = vmatpush.xpose.msra.mxu0 0.0
    %784 = vmatpush.xpose.msra.mxu0 0.0
    %785 = vmatpush.xpose.msra.mxu0 0.0
    %786 = vmatpush.xpose.msra.mxu0 %v647
    %787 = vmatpush.xpose.msra.mxu0 %v631
    %788 = vmatpush.xpose.msra.mxu0 %v615
    %789 = vmatpush.xpose.msra.mxu0 %v599
    %790 = vmatmul.f32.gmra.mxu0 %v663
    %v791 = vpop.f32.mrf.mxu0
    %v792 = vadd.f32 %v772, %v791
    %793 = vdwg.mxu0
    %794 = vmatpush.xpose.msra.mxu0 0.0
    %795 = vmatpush.xpose.msra.mxu0 0.0
    %796 = vmatpush.xpose.msra.mxu0 0.0
    %797 = vmatpush.xpose.msra.mxu0 0.0
    %798 = vmatpush.xpose.msra.mxu0 0.0
    %799 = vmatpush.xpose.msra.mxu0 0.0
    %800 = vmatpush.xpose.msra.mxu0 0.0
    %801 = vmatpush.xpose.msra.mxu0 0.0
    %802 = vmatpush.xpose.msra.mxu0 0.0
    %803 = vmatpush.xpose.msra.mxu0 0.0
    %804 = vmatpush.xpose.msra.mxu0 0.0
    %805 = vmatpush.xpose.msra.mxu0 0.0
    %806 = vmatpush.xpose.msra.mxu0 %v648
    %807 = vmatpush.xpose.msra.mxu0 %v632
    %808 = vmatpush.xpose.msra.mxu0 %v616
    %809 = vmatpush.xpose.msra.mxu0 %v600
    %810 = vmatmul.f32.gmra.mxu0 %v664
    %v811 = vpop.f32.mrf.mxu0
    %v812 = vadd.f32 %v792, %v811
    %813 = vdwg.mxu0
    %814 = vmatpush.xpose.msra.mxu0 0.0
    %815 = vmatpush.xpose.msra.mxu0 0.0
    %816 = vmatpush.xpose.msra.mxu0 0.0
    %817 = vmatpush.xpose.msra.mxu0 0.0
    %818 = vmatpush.xpose.msra.mxu0 0.0
    %819 = vmatpush.xpose.msra.mxu0 0.0
    %820 = vmatpush.xpose.msra.mxu0 0.0
    %821 = vmatpush.xpose.msra.mxu0 0.0
    %822 = vmatpush.xpose.msra.mxu0 0.0
    %823 = vmatpush.xpose.msra.mxu0 0.0
    %824 = vmatpush.xpose.msra.mxu0 0.0
    %825 = vmatpush.xpose.msra.mxu0 0.0
    %826 = vmatpush.xpose.msra.mxu0 %v649
    %827 = vmatpush.xpose.msra.mxu0 %v633
    %828 = vmatpush.xpose.msra.mxu0 %v617
    %829 = vmatpush.xpose.msra.mxu0 %v601
    %830 = vmatmul.f32.gmra.mxu0 %v665
    %v831 = vpop.f32.mrf.mxu0
    %v832 = vadd.f32 %v812, %v831
    %833 = vdwg.mxu0
    %834 = vmatpush.xpose.msra.mxu0 0.0
    %835 = vmatpush.xpose.msra.mxu0 0.0
    %836 = vmatpush.xpose.msra.mxu0 0.0
    %837 = vmatpush.xpose.msra.mxu0 0.0
    %838 = vmatpush.xpose.msra.mxu0 0.0
    %839 = vmatpush.xpose.msra.mxu0 0.0
    %840 = vmatpush.xpose.msra.mxu0 0.0
    %841 = vmatpush.xpose.msra.mxu0 0.0
    %842 = vmatpush.xpose.msra.mxu0 0.0
    %843 = vmatpush.xpose.msra.mxu0 0.0
    %844 = vmatpush.xpose.msra.mxu0 0.0
    %845 = vmatpush.xpose.msra.mxu0 0.0
    %846 = vmatpush.xpose.msra.mxu0 %v650
    %847 = vmatpush.xpose.msra.mxu0 %v634
    %848 = vmatpush.xpose.msra.mxu0 %v618
    %849 = vmatpush.xpose.msra.mxu0 %v602
    %850 = vmatmul.f32.gmra.mxu0 %v666
    %v851 = vpop.f32.mrf.mxu0
    %v852 = vadd.f32 %v832, %v851
    %853 = vdwg.mxu0
    %854 = vmatpush.xpose.msra.mxu0 0.0
    %855 = vmatpush.xpose.msra.mxu0 0.0
    %856 = vmatpush.xpose.msra.mxu0 0.0
    %857 = vmatpush.xpose.msra.mxu0 0.0
    %858 = vmatpush.xpose.msra.mxu0 0.0
    %859 = vmatpush.xpose.msra.mxu0 0.0
    %860 = vmatpush.xpose.msra.mxu0 0.0
    %861 = vmatpush.xpose.msra.mxu0 0.0
    %862 = vmatpush.xpose.msra.mxu0 0.0
    %863 = vmatpush.xpose.msra.mxu0 0.0
    %864 = vmatpush.xpose.msra.mxu0 0.0
    %865 = vmatpush.xpose.msra.mxu0 0.0
    %866 = vmatpush.xpose.msra.mxu0 %v651
    %867 = vmatpush.xpose.msra.mxu0 %v635
    %868 = vmatpush.xpose.msra.mxu0 %v619
    %869 = vmatpush.xpose.msra.mxu0 %v603
    %870 = vmatmul.f32.gmra.mxu0 %v667
    %v871 = vpop.f32.mrf.mxu0
    %v872 = vadd.f32 %v852, %v871
    %873 = vdwg.mxu0
    %874 = vmatpush.xpose.msra.mxu0 0.0
    %875 = vmatpush.xpose.msra.mxu0 0.0
    %876 = vmatpush.xpose.msra.mxu0 0.0
    %877 = vmatpush.xpose.msra.mxu0 0.0
    %878 = vmatpush.xpose.msra.mxu0 0.0
    %879 = vmatpush.xpose.msra.mxu0 0.0
    %880 = vmatpush.xpose.msra.mxu0 0.0
    %881 = vmatpush.xpose.msra.mxu0 0.0
    %882 = vmatpush.xpose.msra.mxu0 0.0
    %883 = vmatpush.xpose.msra.mxu0 0.0
    %884 = vmatpush.xpose.msra.mxu0 0.0
    %885 = vmatpush.xpose.msra.mxu0 0.0
    %886 = vmatpush.xpose.msra.mxu0 %v652
    %887 = vmatpush.xpose.msra.mxu0 %v636
    %888 = vmatpush.xpose.msra.mxu0 %v620
    %889 = vmatpush.xpose.msra.mxu0 %v604
    %890 = vmatmul.f32.gmra.mxu0 %v668
    %v891 = vpop.f32.mrf.mxu0
    %v892 = vadd.f32 %v872, %v891
    %893 = vdwg.mxu0
    %894 = vmatpush.xpose.msra.mxu0 0.0
    %895 = vmatpush.xpose.msra.mxu0 0.0
    %896 = vmatpush.xpose.msra.mxu0 0.0
    %897 = vmatpush.xpose.msra.mxu0 0.0
    %898 = vmatpush.xpose.msra.mxu0 0.0
    %899 = vmatpush.xpose.msra.mxu0 0.0
    %900 = vmatpush.xpose.msra.mxu0 0.0
    %901 = vmatpush.xpose.msra.mxu0 0.0
    %902 = vmatpush.xpose.msra.mxu0 0.0
    %903 = vmatpush.xpose.msra.mxu0 0.0
    %904 = vmatpush.xpose.msra.mxu0 0.0
    %905 = vmatpush.xpose.msra.mxu0 0.0
    %906 = vmatpush.xpose.msra.mxu0 %v653
    %907 = vmatpush.xpose.msra.mxu0 %v637
    %908 = vmatpush.xpose.msra.mxu0 %v621
    %909 = vmatpush.xpose.msra.mxu0 %v605
    %910 = vmatmul.f32.gmra.mxu0 %v669
    %v911 = vpop.f32.mrf.mxu0
    %v912 = vadd.f32 %v892, %v911
    %913 = vdwg.mxu0
    %914 = vmatpush.xpose.msra.mxu0 0.0
    %915 = vmatpush.xpose.msra.mxu0 0.0
    %916 = vmatpush.xpose.msra.mxu0 0.0
    %917 = vmatpush.xpose.msra.mxu0 0.0
    %918 = vmatpush.xpose.msra.mxu0 0.0
    %919 = vmatpush.xpose.msra.mxu0 0.0
    %920 = vmatpush.xpose.msra.mxu0 0.0
    %921 = vmatpush.xpose.msra.mxu0 0.0
    %922 = vmatpush.xpose.msra.mxu0 0.0
    %923 = vmatpush.xpose.msra.mxu0 0.0
    %924 = vmatpush.xpose.msra.mxu0 0.0
    %925 = vmatpush.xpose.msra.mxu0 0.0
    %926 = vmatpush.xpose.msra.mxu0 %v654
    %927 = vmatpush.xpose.msra.mxu0 %v638
    %928 = vmatpush.xpose.msra.mxu0 %v622
    %929 = vmatpush.xpose.msra.mxu0 %v606
    %930 = vmatmul.f32.gmra.mxu0 %v670
    %v931 = vpop.f32.mrf.mxu0
    %v932 = vadd.f32 %v912, %v931
    %933 = vdwg.mxu0
    %934 = vmatpush.xpose.msra.mxu0 0.0
    %935 = vmatpush.xpose.msra.mxu0 0.0
    %936 = vmatpush.xpose.msra.mxu0 0.0
    %937 = vmatpush.xpose.msra.mxu0 0.0
    %938 = vmatpush.xpose.msra.mxu0 0.0
    %939 = vmatpush.xpose.msra.mxu0 0.0
    %940 = vmatpush.xpose.msra.mxu0 0.0
    %941 = vmatpush.xpose.msra.mxu0 0.0
    %942 = vmatpush.xpose.msra.mxu0 0.0
    %943 = vmatpush.xpose.msra.mxu0 0.0
    %944 = vmatpush.xpose.msra.mxu0 0.0
    %945 = vmatpush.xpose.msra.mxu0 0.0
    %946 = vmatpush.xpose.msra.mxu0 %v655
    %947 = vmatpush.xpose.msra.mxu0 %v639
    %948 = vmatpush.xpose.msra.mxu0 %v623
    %949 = vmatpush.xpose.msra.mxu0 %v607
    %950 = vmatmul.f32.gmra.mxu0 %v671
    %v951 = vpop.f32.mrf.mxu0
    %v952 = vadd.f32 %v932, %v951
    %953 = vdwg.mxu0
    %954 = vmatpush.xpose.msra.mxu0 0.0
    %955 = vmatpush.xpose.msra.mxu0 0.0
    %956 = vmatpush.xpose.msra.mxu0 0.0
    %957 = vmatpush.xpose.msra.mxu0 0.0
    %958 = vmatpush.xpose.msra.mxu0 0.0
    %959 = vmatpush.xpose.msra.mxu0 0.0
    %960 = vmatpush.xpose.msra.mxu0 0.0
    %961 = vmatpush.xpose.msra.mxu0 0.0
    %962 = vmatpush.xpose.msra.mxu0 0.0
    %963 = vmatpush.xpose.msra.mxu0 0.0
    %964 = vmatpush.xpose.msra.mxu0 0.0
    %965 = vmatpush.xpose.msra.mxu0 0.0
    %966 = vmatpush.xpose.msra.mxu0 %v656
    %967 = vmatpush.xpose.msra.mxu0 %v640
    %968 = vmatpush.xpose.msra.mxu0 %v624
    %969 = vmatpush.xpose.msra.mxu0 %v608
    %970 = vmatmul.f32.gmra.mxu0 %v672
    %v971 = vpop.f32.mrf.mxu0
    %v972 = vadd.f32 %v952, %v971
    %973 = vdwg.mxu0
    %974 = vmatpush.xpose.msra.mxu0 0.0
    %975 = vmatpush.xpose.msra.mxu0 0.0
    %976 = vmatpush.xpose.msra.mxu0 0.0
    %977 = vmatpush.xpose.msra.mxu0 0.0
    %978 = vmatpush.xpose.msra.mxu0 0.0
    %979 = vmatpush.xpose.msra.mxu0 0.0
    %980 = vmatpush.xpose.msra.mxu0 0.0
    %981 = vmatpush.xpose.msra.mxu0 0.0
    %982 = vmatpush.xpose.msra.mxu0 0.0
    %983 = vmatpush.xpose.msra.mxu0 0.0
    %984 = vmatpush.xpose.msra.mxu0 0.0
    %985 = vmatpush.xpose.msra.mxu0 0.0
    %986 = vmatpush.xpose.msra.mxu0 %v657
    %987 = vmatpush.xpose.msra.mxu0 %v641
    %988 = vmatpush.xpose.msra.mxu0 %v625
    %989 = vmatpush.xpose.msra.mxu0 %v609
    %990 = vmatmul.f32.gmra.mxu0 %v673
    %v991 = vpop.f32.mrf.mxu0
    %v992 = vadd.f32 %v972, %v991
    %993 = vdwg.mxu0
    %v994 = vld [vmem:[%s3] sm:$0xff]
    %v995 = vld [vmem:[%s3 + $0x8] sm:$0xff]
    %v996 = vld [vmem:[%s3 + $0x10] sm:$0xff]
    %v997 = vld [vmem:[%s3 + $0x18] sm:$0xff]
    %v998 = vld [vmem:[%s3 + $0x20] sm:$0xff]
    %v999 = vld [vmem:[%s3 + $0x28] sm:$0xff]
    %v1000 = vld [vmem:[%s3 + $0x30] sm:$0xff]
    %v1001 = vld [vmem:[%s3 + $0x38] sm:$0xff]
    %v1002 = vld [vmem:[%s3 + $0x40] sm:$0xff]
    %v1003 = vld [vmem:[%s3 + $0x48] sm:$0xff]
    %v1004 = vld [vmem:[%s3 + $0x50] sm:$0xff]
    %v1005 = vld [vmem:[%s3 + $0x58] sm:$0xff]
    %v1006 = vld [vmem:[%s3 + $0x60] sm:$0xff]
    %v1007 = vld [vmem:[%s3 + $0x68] sm:$0xff]
    %v1008 = vld [vmem:[%s3 + $0x70] sm:$0xff]
    %v1009 = vld [vmem:[%s3 + $0x78] sm:$0xff]
    %v1011 = vrot.slane %v992, 2
    %vm1012 = vcmask 261120
    %v1013 = vsel %vm1012, %v1011, 0
    %1015 = vmatpush.msra.mxu0 0.0
    %1016 = vmatpush.msra.mxu0 0.0
    %1017 = vmatpush.msra.mxu0 0.0
    %1018 = vmatpush.msra.mxu0 0.0
    %1019 = vmatpush.msra.mxu0 0.0
    %1020 = vmatpush.msra.mxu0 0.0
    %1021 = vmatpush.msra.mxu0 0.0
    %1022 = vmatpush.msra.mxu0 0.0
    %1023 = vmatpush.msra.mxu0 0.0
    %1024 = vmatpush.msra.mxu0 0.0
    %1025 = vmatpush.msra.mxu0 0.0
    %1026 = vmatpush.msra.mxu0 0.0
    %1027 = vmatpush.msra.mxu0 %v1008
    %1028 = vmatpush.msra.mxu0 %v1006
    %1029 = vmatpush.msra.mxu0 %v1004
    %1030 = vmatpush.msra.mxu0 %v1002
    %1031 = vmatmul.f32.gmra.mxu0 %v1013
    %v1032 = vpop.f32.mrf.mxu0
    %v1033 = vadd.f32 0.0, %v1032
    %1034 = vdwg.mxu0
    %1035 = vmatpush.msra.mxu0 0.0
    %1036 = vmatpush.msra.mxu0 0.0
    %1037 = vmatpush.msra.mxu0 0.0
    %1038 = vmatpush.msra.mxu0 0.0
    %1039 = vmatpush.msra.mxu0 0.0
    %1040 = vmatpush.msra.mxu0 0.0
    %1041 = vmatpush.msra.mxu0 0.0
    %1042 = vmatpush.msra.mxu0 0.0
    %1043 = vmatpush.msra.mxu0 0.0
    %1044 = vmatpush.msra.mxu0 0.0
    %1045 = vmatpush.msra.mxu0 0.0
    %1046 = vmatpush.msra.mxu0 0.0
    %1047 = vmatpush.msra.mxu0 %v1009
    %1048 = vmatpush.msra.mxu0 %v1007
    %1049 = vmatpush.msra.mxu0 %v1005
    %1050 = vmatpush.msra.mxu0 %v1003
    %1051 = vmatmul.f32.gmra.mxu0 %v1013
    %v1052 = vpop.f32.mrf.mxu0
    %v1053 = vadd.f32 0.0, %v1052
    %1054 = vdwg.mxu0
    %v1055 = vsel %vm1012, %v992, 0
    %1057 = vmatpush.msra.mxu0 0.0
    %1058 = vmatpush.msra.mxu0 0.0
    %1059 = vmatpush.msra.mxu0 0.0
    %1060 = vmatpush.msra.mxu0 0.0
    %1061 = vmatpush.msra.mxu0 0.0
    %1062 = vmatpush.msra.mxu0 0.0
    %1063 = vmatpush.msra.mxu0 0.0
    %1064 = vmatpush.msra.mxu0 0.0
    %1065 = vmatpush.msra.mxu0 0.0
    %1066 = vmatpush.msra.mxu0 0.0
    %1067 = vmatpush.msra.mxu0 0.0
    %1068 = vmatpush.msra.mxu0 0.0
    %1069 = vmatpush.msra.mxu0 %v1000
    %1070 = vmatpush.msra.mxu0 %v998
    %1071 = vmatpush.msra.mxu0 %v996
    %1072 = vmatpush.msra.mxu0 %v994
    %1073 = vmatmul.f32.gmra.mxu0 %v1055
    %v1074 = vpop.f32.mrf.mxu0
    %v1075 = vadd.f32 %v1033, %v1074
    %1076 = vdwg.mxu0
    %1077 = vmatpush.msra.mxu0 0.0
    %1078 = vmatpush.msra.mxu0 0.0
    %1079 = vmatpush.msra.mxu0 0.0
    %1080 = vmatpush.msra.mxu0 0.0
    %1081 = vmatpush.msra.mxu0 0.0
    %1082 = vmatpush.msra.mxu0 0.0
    %1083 = vmatpush.msra.mxu0 0.0
    %1084 = vmatpush.msra.mxu0 0.0
    %1085 = vmatpush.msra.mxu0 0.0
    %1086 = vmatpush.msra.mxu0 0.0
    %1087 = vmatpush.msra.mxu0 0.0
    %1088 = vmatpush.msra.mxu0 0.0
    %1089 = vmatpush.msra.mxu0 %v1001
    %1090 = vmatpush.msra.mxu0 %v999
    %1091 = vmatpush.msra.mxu0 %v997
    %1092 = vmatpush.msra.mxu0 %v995
    %1093 = vmatmul.f32.gmra.mxu0 %v1055
    %v1094 = vpop.f32.mrf.mxu0
    %v1095 = vadd.f32 %v1053, %v1094
    %1096 = vdwg.mxu0
    %v1097 = vld [vmem:[%s3 + $0x80] sm:$0xff]
    %v1098 = vld [vmem:[%s3 + $0x88] sm:$0xff]
    %v1099 = vld [vmem:[%s3 + $0x90] sm:$0xff]
    %v1100 = vld [vmem:[%s3 + $0x98] sm:$0xff]
    %v1101 = vld [vmem:[%s3 + $0xa0] sm:$0xff]
    %v1102 = vld [vmem:[%s3 + $0xa8] sm:$0xff]
    %v1103 = vld [vmem:[%s3 + $0xb0] sm:$0xff]
    %v1104 = vld [vmem:[%s3 + $0xb8] sm:$0xff]
    %v1105 = vrot.slane %v992, 4
    %v1106 = vsel %vm1012, %v1105, 0
    %1108 = vmatpush.msra.mxu0 0.0
    %1109 = vmatpush.msra.mxu0 0.0
    %1110 = vmatpush.msra.mxu0 0.0
    %1111 = vmatpush.msra.mxu0 0.0
    %1112 = vmatpush.msra.mxu0 0.0
    %1113 = vmatpush.msra.mxu0 0.0
    %1114 = vmatpush.msra.mxu0 0.0
    %1115 = vmatpush.msra.mxu0 0.0
    %1116 = vmatpush.msra.mxu0 0.0
    %1117 = vmatpush.msra.mxu0 0.0
    %1118 = vmatpush.msra.mxu0 0.0
    %1119 = vmatpush.msra.mxu0 0.0
    %1120 = vmatpush.msra.mxu0 %v1103
    %1121 = vmatpush.msra.mxu0 %v1101
    %1122 = vmatpush.msra.mxu0 %v1099
    %1123 = vmatpush.msra.mxu0 %v1097
    %1124 = vmatmul.f32.gmra.mxu0 %v1106
    %v1125 = vpop.f32.mrf.mxu0
    %v1126 = vadd.f32 0.0, %v1125
    %1127 = vdwg.mxu0
    %1128 = vmatpush.msra.mxu0 0.0
    %1129 = vmatpush.msra.mxu0 0.0
    %1130 = vmatpush.msra.mxu0 0.0
    %1131 = vmatpush.msra.mxu0 0.0
    %1132 = vmatpush.msra.mxu0 0.0
    %1133 = vmatpush.msra.mxu0 0.0
    %1134 = vmatpush.msra.mxu0 0.0
    %1135 = vmatpush.msra.mxu0 0.0
    %1136 = vmatpush.msra.mxu0 0.0
    %1137 = vmatpush.msra.mxu0 0.0
    %1138 = vmatpush.msra.mxu0 0.0
    %1139 = vmatpush.msra.mxu0 0.0
    %1140 = vmatpush.msra.mxu0 %v1104
    %1141 = vmatpush.msra.mxu0 %v1102
    %1142 = vmatpush.msra.mxu0 %v1100
    %1143 = vmatpush.msra.mxu0 %v1098
    %1144 = vmatmul.f32.gmra.mxu0 %v1106
    %v1145 = vpop.f32.mrf.mxu0
    %v1146 = vadd.f32 0.0, %v1145
    %1147 = vdwg.mxu0
    %v1148 = vadd.f32 %v1075, %v1126
    %v1149 = vadd.f32 %v1095, %v1146
    %v1150 = vld [vmem:[%s3 + $0xc0] sm:$0xff]
    %v1151 = vld [vmem:[%s3 + $0xc8] sm:$0xff]
    %v1152 = vld [vmem:[%s3 + $0xd0] sm:$0xff]
    %v1153 = vld [vmem:[%s3 + $0xd8] sm:$0xff]
    %v1154 = vld [vmem:[%s3 + $0xe0] sm:$0xff]
    %v1155 = vld [vmem:[%s3 + $0xe8] sm:$0xff]
    %v1156 = vld [vmem:[%s3 + $0xf0] sm:$0xff]
    %v1157 = vld [vmem:[%s3 + $0xf8] sm:$0xff]
    %v1158 = vrot.slane %v992, 6
    %v1159 = vsel %vm1012, %v1158, 0
    %1161 = vmatpush.msra.mxu0 0.0
    %1162 = vmatpush.msra.mxu0 0.0
    %1163 = vmatpush.msra.mxu0 0.0
    %1164 = vmatpush.msra.mxu0 0.0
    %1165 = vmatpush.msra.mxu0 0.0
    %1166 = vmatpush.msra.mxu0 0.0
    %1167 = vmatpush.msra.mxu0 0.0
    %1168 = vmatpush.msra.mxu0 0.0
    %1169 = vmatpush.msra.mxu0 0.0
    %1170 = vmatpush.msra.mxu0 0.0
    %1171 = vmatpush.msra.mxu0 0.0
    %1172 = vmatpush.msra.mxu0 0.0
    %1173 = vmatpush.msra.mxu0 %v1156
    %1174 = vmatpush.msra.mxu0 %v1154
    %1175 = vmatpush.msra.mxu0 %v1152
    %1176 = vmatpush.msra.mxu0 %v1150
    %1177 = vmatmul.f32.gmra.mxu0 %v1159
    %v1178 = vpop.f32.mrf.mxu0
    %v1179 = vadd.f32 0.0, %v1178
    %1180 = vdwg.mxu0
    %1181 = vmatpush.msra.mxu0 0.0
    %1182 = vmatpush.msra.mxu0 0.0
    %1183 = vmatpush.msra.mxu0 0.0
    %1184 = vmatpush.msra.mxu0 0.0
    %1185 = vmatpush.msra.mxu0 0.0
    %1186 = vmatpush.msra.mxu0 0.0
    %1187 = vmatpush.msra.mxu0 0.0
    %1188 = vmatpush.msra.mxu0 0.0
    %1189 = vmatpush.msra.mxu0 0.0
    %1190 = vmatpush.msra.mxu0 0.0
    %1191 = vmatpush.msra.mxu0 0.0
    %1192 = vmatpush.msra.mxu0 0.0
    %1193 = vmatpush.msra.mxu0 %v1157
    %1194 = vmatpush.msra.mxu0 %v1155
    %1195 = vmatpush.msra.mxu0 %v1153
    %1196 = vmatpush.msra.mxu0 %v1151
    %1197 = vmatmul.f32.gmra.mxu0 %v1159
    %v1198 = vpop.f32.mrf.mxu0
    %v1199 = vadd.f32 0.0, %v1198
    %1200 = vdwg.mxu0
    %v1201 = vadd.f32 %v1148, %v1179
    %v1202 = vadd.f32 %v1149, %v1199
    %v1203 = vld [vmem:[%s4] sm:$0x3]
    %v1205 = vperm.slane %v1203, 0
    %v1206 = vperm.slane %v1203, 1
    %v1209 = vadd.f32 %v1201, %v1205
    %v1210 = vadd.f32 %v1202, %v1206
    %v1211 = vmax.f32 %v1209, 0.0
    %v1212 = vmax.f32 %v1210, 0.0
    %v1213 = vld [vmem:[%s5] sm:$0xff]
    %v1214 = vld [vmem:[%s5 + $0x8] sm:$0xff]
    %v1215 = vld [vmem:[%s5 + $0x10] sm:$0xff]
    %v1216 = vld [vmem:[%s5 + $0x18] sm:$0xff]
    %v1217 = vld [vmem:[%s5 + $0x20] sm:$0xff]
    %v1218 = vld [vmem:[%s5 + $0x28] sm:$0xff]
    %v1219 = vld [vmem:[%s5 + $0x30] sm:$0xff]
    %v1220 = vld [vmem:[%s5 + $0x38] sm:$0xff]
    %v1221 = vld [vmem:[%s5 + $0x40] sm:$0xff]
    %v1222 = vld [vmem:[%s5 + $0x48] sm:$0xff]
    %v1223 = vld [vmem:[%s5 + $0x50] sm:$0xff]
    %v1224 = vld [vmem:[%s5 + $0x58] sm:$0xff]
    %v1225 = vld [vmem:[%s5 + $0x60] sm:$0xff]
    %v1226 = vld [vmem:[%s5 + $0x68] sm:$0xff]
    %v1227 = vld [vmem:[%s5 + $0x70] sm:$0xff]
    %v1228 = vld [vmem:[%s5 + $0x78] sm:$0xff]
    %v1229 = vld [vmem:[%s5 + $0x80] sm:$0xff]
    %v1230 = vld [vmem:[%s5 + $0x88] sm:$0xff]
    %v1231 = vld [vmem:[%s5 + $0x90] sm:$0xff]
    %v1232 = vld [vmem:[%s5 + $0x98] sm:$0xff]
    %v1233 = vld [vmem:[%s5 + $0xa0] sm:$0xff]
    %v1234 = vld [vmem:[%s5 + $0xa8] sm:$0xff]
    %v1235 = vld [vmem:[%s5 + $0xb0] sm:$0xff]
    %v1236 = vld [vmem:[%s5 + $0xb8] sm:$0xff]
    %v1237 = vld [vmem:[%s5 + $0xc0] sm:$0xff]
    %v1238 = vld [vmem:[%s5 + $0xc8] sm:$0xff]
    %v1239 = vld [vmem:[%s5 + $0xd0] sm:$0xff]
    %v1240 = vld [vmem:[%s5 + $0xd8] sm:$0xff]
    %v1241 = vld [vmem:[%s5 + $0xe0] sm:$0xff]
    %v1242 = vld [vmem:[%s5 + $0xe8] sm:$0xff]
    %v1243 = vld [vmem:[%s5 + $0xf0] sm:$0xff]
    %v1244 = vld [vmem:[%s5 + $0xf8] sm:$0xff]
    %v1245 = vld [vmem:[%s6] sm:$0x1]
    %v1247 = vperm.slane %v1245, 0
    %1249 = vmatpush.msra.mxu0 %v1228
    %1250 = vmatpush.msra.mxu0 %v1227
    %1251 = vmatpush.msra.mxu0 %v1226
    %1252 = vmatpush.msra.mxu0 %v1225
    %1253 = vmatpush.msra.mxu0 %v1224
    %1254 = vmatpush.msra.mxu0 %v1223
    %1255 = vmatpush.msra.mxu0 %v1222
    %1256 = vmatpush.msra.mxu0 %v1221
    %1257 = vmatpush.msra.mxu0 %v1220
    %1258 = vmatpush.msra.mxu0 %v1219
    %1259 = vmatpush.msra.mxu0 %v1218
    %1260 = vmatpush.msra.mxu0 %v1217
    %1261 = vmatpush.msra.mxu0 %v1216
    %1262 = vmatpush.msra.mxu0 %v1215
    %1263 = vmatpush.msra.mxu0 %v1214
    %1264 = vmatpush.msra.mxu0 %v1213
    %1265 = vmatmul.f32.gmra.mxu0 %v1211
    %v1266 = vpop.f32.mrf.mxu0
    %v1267 = vadd.f32 %v1247, %v1266
    %1268 = vdwg.mxu0
    %1269 = vmatpush.msra.mxu0 %v1244
    %1270 = vmatpush.msra.mxu0 %v1243
    %1271 = vmatpush.msra.mxu0 %v1242
    %1272 = vmatpush.msra.mxu0 %v1241
    %1273 = vmatpush.msra.mxu0 %v1240
    %1274 = vmatpush.msra.mxu0 %v1239
    %1275 = vmatpush.msra.mxu0 %v1238
    %1276 = vmatpush.msra.mxu0 %v1237
    %1277 = vmatpush.msra.mxu0 %v1236
    %1278 = vmatpush.msra.mxu0 %v1235
    %1279 = vmatpush.msra.mxu0 %v1234
    %1280 = vmatpush.msra.mxu0 %v1233
    %1281 = vmatpush.msra.mxu0 %v1232
    %1282 = vmatpush.msra.mxu0 %v1231
    %1283 = vmatpush.msra.mxu0 %v1230
    %1284 = vmatpush.msra.mxu0 %v1229
    %1285 = vmatmul.f32.gmra.mxu0 %v1212
    %v1286 = vpop.f32.mrf.mxu0
    %v1287 = vadd.f32 %v1267, %v1286
    %1288 = vdwg.mxu0
    %v1289 = vmax.f32 %v1287, 0.0
    %v1290 = vld [vmem:[%s7] sm:$0xff]
    %v1291 = vld [vmem:[%s7 + $0x8] sm:$0xff]
    %v1292 = vld [vmem:[%s7 + $0x10] sm:$0xff]
    %v1293 = vld [vmem:[%s7 + $0x18] sm:$0xff]
    %v1294 = vld [vmem:[%s7 + $0x20] sm:$0xff]
    %v1295 = vld [vmem:[%s7 + $0x28] sm:$0xff]
    %v1296 = vld [vmem:[%s7 + $0x30] sm:$0xff]
    %v1297 = vld [vmem:[%s7 + $0x38] sm:$0xff]
    %v1298 = vld [vmem:[%s7 + $0x40] sm:$0xff]
    %v1299 = vld [vmem:[%s7 + $0x48] sm:$0xff]
    %v1300 = vld [vmem:[%s7 + $0x50] sm:$0xff]
    %v1301 = vld [vmem:[%s7 + $0x58] sm:$0xff]
    %v1302 = vld [vmem:[%s7 + $0x60] sm:$0xff]
    %v1303 = vld [vmem:[%s7 + $0x68] sm:$0xff]
    %v1304 = vld [vmem:[%s7 + $0x70] sm:$0xff]
    %v1305 = vld [vmem:[%s7 + $0x78] sm:$0xff]
    %v1306 = vld [vmem:[%s8] sm:$0x1]
    %v1308 = vperm.slane %v1306, 0
    %1310 = vmatpush.msra.mxu0 %v1305
    %1311 = vmatpush.msra.mxu0 %v1304
    %1312 = vmatpush.msra.mxu0 %v1303
    %1313 = vmatpush.msra.mxu0 %v1302
    %1314 = vmatpush.msra.mxu0 %v1301
    %1315 = vmatpush.msra.mxu0 %v1300
    %1316 = vmatpush.msra.mxu0 %v1299
    %1317 = vmatpush.msra.mxu0 %v1298
    %1318 = vmatpush.msra.mxu0 %v1297
    %1319 = vmatpush.msra.mxu0 %v1296
    %1320 = vmatpush.msra.mxu0 %v1295
    %1321 = vmatpush.msra.mxu0 %v1294
    %1322 = vmatpush.msra.mxu0 %v1293
    %1323 = vmatpush.msra.mxu0 %v1292
    %1324 = vmatpush.msra.mxu0 %v1291
    %1325 = vmatpush.msra.mxu0 %v1290
    %1326 = vmatmul.f32.gmra.mxu0 %v1289
    %v1327 = vpop.f32.mrf.mxu0
    %v1328 = vadd.f32 %v1308, %v1327
    %1329 = vdwg.mxu0
    %1330 = vst [vmem:[#allocation2] sm:$0x3] %v1328
    // Predicated region
    $region38: #{second_stage_forward.1} parent=1 // pred_check
      _
    $region39: #{second_stage_forward.1} parent=1 // pred_check_branch
      %1332 = sbr.rel (0) target = $region41
    $region40: #{second_stage_forward.1} parent=1 // pred_region
      %1334 = vsyncadd [#allocation3], 0
      %s1336 = sshll.u32 [#allocation2], 4
      %s1337 = int_to_ptr.vmem [resolvable:$true] %s1336
      %s1338 = sshll.u32 %s9, 4
      %s1339 = int_to_ptr.hbm [resolvable:$true] %s1338
      %1341 = dma.vmem_to_hbm [thread:$0]  %s1337, 32, %s1339, [#allocation3]
    $region41: #{second_stage_forward.1} parent=1 // pred_fallthru
      _
    // Predicated region
    $region42: #{second_stage_forward.1} parent=1 // pred_check
      _
    $region43: #{second_stage_forward.1} parent=1 // pred_check_branch
      %1343 = sbr.rel (0) target = $region45
    $region44: #{second_stage_forward.1} parent=1 // pred_region
      %1345 = dma.done [#allocation3], 32
    $region45: #{second_stage_forward.1} parent=1 // pred_fallthru
      _
    %1346 = vsyncpa [#allocation3], 1

</llo_original>
